<compile_context>
chip_gen: v6e
topology: v6e:2x2x1
jax: 0.10.0
libtpu: 0.0.40
codegen_flags: <defaults>
</compile_context>

<pallas_src>
import jax
import jax.numpy as jnp
from jax import lax
from jax.experimental import pallas as pl
from jax.experimental.pallas import tpu as pltpu


def _make_hor_kernel(c):
    f32 = jnp.float32
    bf16 = jnp.bfloat16

    def hor_kernel(xl_ref, x_ref, wxl_ref, wx_ref, we_ref,
                   bxl_ref, bx_ref, be_ref, out_ref):
        xl_b = xl_ref[0]                     # (C, HW) bf16, x_latter (channels-major)
        x_b = x_ref[0]                       # (C, HW) bf16, x

        # Fused 1x1 convs (channels-major: y = W @ x + b); bf16 operands, f32 accumulation.
        # wxl rows = [high; latter], wx rows = [low; value; mid].
        cxl = jnp.dot(wxl_ref[...], xl_b, preferred_element_type=f32) + bxl_ref[...]  # (2C, HW)
        cx = jnp.dot(wx_ref[...], x_b, preferred_element_type=f32) + bx_ref[...]      # (3C, HW)

        h_ = cxl[:c]                         # high(x_latter)   (C, HW) f32
        lat = cxl[c:2 * c]                   # latter(x_latter) (C, HW) f32
        l_ = cx[:c]                          # low(x)           (C, HW) f32
        v_ = cx[c:2 * c]                     # value(x)         (C, HW) f32
        m_ = cx[2 * c:3 * c]                 # mid(x)           (C, HW) f32

        # p[i, j] = sum_c low[c, i] * high[c, j]  -> (HW, HW)
        p = lax.dot_general(l_.astype(bf16), h_.astype(bf16),
                            (((0,), (0,)), ((), ())), preferred_element_type=f32)
        # torch softmax(dim=1): normalize over rows i, per column j.  Deferred
        # normalization: keep exp(p - max) un-normalized in f32 and fold 1/Z into the
        # columns of value (j is the contraction axis of the e-matmul).
        p = jnp.exp(p - jnp.max(p, axis=0, keepdims=True))       # f32, values in (0, 1]
        inv_z = 1.0 / jnp.sum(p, axis=0, keepdims=True)          # (1, HW) exact reciprocal
        v_scaled = v_ * inv_z                                    # (C, HW) f32

        # e[c, i] = sum_j (value[c, j] / Z[j]) * exp_p[i, j] + low[c, i]
        e = lax.dot_general(v_scaled.astype(bf16), p.astype(bf16),
                            (((1,), (1,)), ((), ())), preferred_element_type=f32) + l_
        e2 = jnp.dot(we_ref[...], e.astype(bf16),
                     preferred_element_type=f32) + be_ref[...]   # e_conv  (C, HW)

        # t[a, b'] = sum_p e2[a, p] * latter[b', p]; compute tT[b', a] directly with a
        # transposed-RHS matmul (free on the MXU) so the final matmul needs no transpose.
        tT = lax.dot_general(lat.astype(bf16), e2.astype(bf16),
                             (((1,), (1,)), ((), ())), preferred_element_type=f32)  # (C, C)
        # torch softmax(dim=1) normalizes over index a == axis 1 of tT; exact recip (tiny).
        tT = jnp.exp(tT - jnp.max(tT, axis=1, keepdims=True))
        tT = tT * (1.0 / jnp.sum(tT, axis=1, keepdims=True))

        # out[b', p] = sum_a t[a, b'] * mid[a, p] = (tT @ mid)[b', p]
        out_ref[0] = jnp.dot(tT.astype(bf16), m_.astype(bf16), preferred_element_type=f32)

    return hor_kernel


def _vmem_limit_bytes(c, hw):
    bf16, f32 = 2, 4
    io = 2 * 2 * c * hw * bf16 + 2 * c * hw * f32    # double-buffered bf16 inputs + f32 output
    wts = 6 * c * c * bf16 + 6 * c * f32             # resident fused weights + biases
    p_bufs = 3 * hw * hw * f32                       # p, exp temporary, bf16 copy (over-estimate)
    conv = 8 * c * hw * f32                          # cxl / cx / e / e2 intermediates
    est = 2 * (io + wts + p_bufs + conv)             # headroom
    return int(min(64 * 1024 * 1024, max(32 * 1024 * 1024, est)))


def hor_forward(x_latter, x, weights, biases):
    """x_latter, x: (B, C, H, W) NCHW.
    weights: (6, C, C) stacked 1x1-conv weights in (out, in) order
             [high, low, value, e_conv, latter, mid].  biases: (6, C)."""
    b, c, h, w = x_latter.shape
    hw = h * w

    # Channels-major (B, C, HW): plain reshape, no transposes.  bf16 MXU operands.
    xl = x_latter.reshape(b, c, hw).astype(jnp.bfloat16)
    xx = x.reshape(b, c, hw).astype(jnp.bfloat16)

    wts = weights.astype(jnp.bfloat16)
    bs = biases.astype(jnp.float32)
    w_xl = jnp.concatenate([wts[0], wts[4]], axis=0)                 # (2C, C)  [high; latter]
    w_x = jnp.concatenate([wts[1], wts[2], wts[5]], axis=0)          # (3C, C)  [low; value; mid]
    w_e = wts[3]                                                     # (C, C)
    b_xl = jnp.concatenate([bs[0], bs[4]], axis=0)[:, None]          # (2C, 1) f32
    b_x = jnp.concatenate([bs[1], bs[2], bs[5]], axis=0)[:, None]    # (3C, 1) f32
    b_e = bs[3][:, None]                                             # (C, 1)  f32

    kernel = _make_hor_kernel(c)

    out = pl.pallas_call(
        kernel,
        out_shape=jax.ShapeDtypeStruct((b, c, hw), jnp.float32),
        grid_spec=pltpu.PrefetchScalarGridSpec(
            num_scalar_prefetch=0,
            grid=(b,),                                           # 1 batch item / step -> megacore on v7x
            in_specs=[
                pl.BlockSpec((1, c, hw), lambda i: (i, 0, 0)),   # x_latter (bf16)
                pl.BlockSpec((1, c, hw), lambda i: (i, 0, 0)),   # x        (bf16)
                pl.BlockSpec((2 * c, c), lambda i: (0, 0)),      # fused [high; latter]
                pl.BlockSpec((3 * c, c), lambda i: (0, 0)),      # fused [low; value; mid]
                pl.BlockSpec((c, c), lambda i: (0, 0)),          # e_conv
                pl.BlockSpec((2 * c, 1), lambda i: (0, 0)),      # fused bias (x_latter path)
                pl.BlockSpec((3 * c, 1), lambda i: (0, 0)),      # fused bias (x path)
                pl.BlockSpec((c, 1), lambda i: (0, 0)),          # e_conv bias
            ],
            out_specs=pl.BlockSpec((1, c, hw), lambda i: (i, 0, 0)),
        ),
        compiler_params=pltpu.CompilerParams(
            dimension_semantics=("parallel",),
            vmem_limit_bytes=_vmem_limit_bytes(c, hw)),
    )(xl, xx, w_xl, w_x, w_e, b_xl, b_x, b_e)

    return out.reshape(b, c, h, w)


def hor_reference(x_latter, x, weights, biases):
    """Pure-JAX f32 mirror of the PyTorch forward (NCHW), for verification."""
    b, c, h, w = x_latter.shape
    hw = h * w

    def conv1x1(inp, i):
        return jnp.einsum('oc,bchw->bohw', weights[i], inp) + biases[i][None, :, None, None]

    x_latter_ = conv1x1(x_latter, 0).reshape(b, c, hw)                       # (b, c, hw)
    x_ = jnp.transpose(conv1x1(x, 1).reshape(b, c, hw), (0, 2, 1))           # (b, hw, c)
    p = jnp.einsum('bic,bcj->bij', x_, x_latter_)                            # (b, hw, hw)
    p = jax.nn.softmax(p, axis=1)
    v = jnp.transpose(conv1x1(x, 2).reshape(b, c, hw), (0, 2, 1))            # (b, hw, c)
    e_ = jnp.einsum('bij,bjc->bic', p, v)
    e = e_ + x_
    e = jnp.transpose(e, (0, 2, 1)).reshape(b, c, h, w)
    e = conv1x1(e, 3).reshape(b, c, hw)                                      # (b, c, hw)
    xl2 = jnp.transpose(conv1x1(x_latter, 4).reshape(b, c, hw), (0, 2, 1))   # (b, hw, c)
    t = jnp.einsum('bij,bjk->bik', e, xl2)                                   # (b, c, c)
    t = jax.nn.softmax(t, axis=1)
    xm = jnp.transpose(conv1x1(x, 5).reshape(b, c, hw), (0, 2, 1))           # (b, hw, c)
    out = jnp.einsum('bic,bck->bik', xm, t)                                  # (b, hw, c)
    return jnp.transpose(out, (0, 2, 1)).reshape(b, c, h, w)


if __name__ == "__main__":
    key = jax.random.PRNGKey(0)
    k_xl, k_x, k_w, k_b = jax.random.split(key, 4)

    B, C, H, W = 2, 64, 8, 8   # module fixes C=64 (all six 1x1 convs are 64->64)
    x_latter = jax.random.normal(k_xl, (B, C, H, W), dtype=jnp.float32)
    x = jax.random.normal(k_x, (B, C, H, W), dtype=jnp.float32)

    # Deterministic synthetic parameters: 6 stacked 1x1 convs (out, in) + biases.
    weights = jax.random.normal(k_w, (6, C, C), dtype=jnp.float32) * 0.05
    biases = jax.random.normal(k_b, (6, C), dtype=jnp.float32) * 0.01

    out = hor_forward(x_latter, x, weights, biases)
    out = jax.block_until_ready(out)

    ref = hor_reference(x_latter, x, weights, biases)
    assert out.shape == (B, C, H, W)
    # Tolerance covers bf16 MXU operands (f32 accumulation) vs. the pure-f32 reference;
    # both softmax normalizations use exact reciprocals.
    max_err = float(jnp.max(jnp.abs(out - ref)))
    assert jnp.allclose(out, ref, rtol=2e-2, atol=1e-2), max_err

    print("KERNEL_OK")
</pallas_src>

<mosaic_0001>
module attributes {stable_mosaic.version = 11 : i64} {
  func.func @hor_kernel(%arg0: i32, %arg1: memref<1x64x64xbf16, #tpu.memory_space<vmem>>, %arg2: memref<1x64x64xbf16, #tpu.memory_space<vmem>>, %arg3: memref<128x64xbf16, #tpu.memory_space<vmem>>, %arg4: memref<192x64xbf16, #tpu.memory_space<vmem>>, %arg5: memref<64x64xbf16, #tpu.memory_space<vmem>>, %arg6: memref<128x1xf32, #tpu.memory_space<vmem>>, %arg7: memref<192x1xf32, #tpu.memory_space<vmem>>, %arg8: memref<64x1xf32, #tpu.memory_space<vmem>>, %arg9: memref<1x64x64xf32, #tpu.memory_space<vmem>>) attributes {dimension_semantics = [#tpu.dimension_semantics<parallel>], iteration_bounds = array<i64: 2>, scalar_prefetch = 0 : i64, scratch_operands = 0 : i64, tpu.core_type = #tpu.core_type<tc>, window_params = [{transform_indices = @transform_0, window_bounds = array<i64: 1, 64, 64>}, {transform_indices = @transform_1, window_bounds = array<i64: 1, 64, 64>}, {pipeline_mode = #tpu.pipeline_mode<synchronous>, transform_indices = @transform_2, window_bounds = array<i64: 128, 64>}, {pipeline_mode = #tpu.pipeline_mode<synchronous>, transform_indices = @transform_3, window_bounds = array<i64: 192, 64>}, {pipeline_mode = #tpu.pipeline_mode<synchronous>, transform_indices = @transform_4, window_bounds = array<i64: 64, 64>}, {pipeline_mode = #tpu.pipeline_mode<synchronous>, transform_indices = @transform_5, window_bounds = array<i64: 128, 1>}, {pipeline_mode = #tpu.pipeline_mode<synchronous>, transform_indices = @transform_6, window_bounds = array<i64: 192, 1>}, {pipeline_mode = #tpu.pipeline_mode<synchronous>, transform_indices = @transform_7, window_bounds = array<i64: 64, 1>}, {transform_indices = @transform_8, window_bounds = array<i64: 1, 64, 64>}]} {
    %c0 = arith.constant 0 : index
    %c0_0 = arith.constant 0 : index
    %c0_1 = arith.constant 0 : index
    %0 = vector.load %arg1[%c0, %c0_0, %c0_1] : memref<1x64x64xbf16, #tpu.memory_space<vmem>>, vector<1x64x64xbf16>
    %1 = vector.shape_cast %0 : vector<1x64x64xbf16> to vector<64x64xbf16>
    %c0_2 = arith.constant 0 : index
    %c0_3 = arith.constant 0 : index
    %c0_4 = arith.constant 0 : index
    %2 = vector.load %arg2[%c0_2, %c0_3, %c0_4] : memref<1x64x64xbf16, #tpu.memory_space<vmem>>, vector<1x64x64xbf16>
    %3 = vector.shape_cast %2 : vector<1x64x64xbf16> to vector<64x64xbf16>
    %c0_5 = arith.constant 0 : index
    %c0_6 = arith.constant 0 : index
    %4 = vector.load %arg3[%c0_5, %c0_6] : memref<128x64xbf16, #tpu.memory_space<vmem>>, vector<128x64xbf16>
    %cst = arith.constant dense<0.000000e+00> : vector<128x64xf32>
    %5 = tpu.matmul %4, %1, %cst {dimension_numbers = #tpu.dot_dimension_numbers<[1], [0], [0], [1], [0, 0, 1, 1], [], []>} : vector<128x64xbf16>, vector<64x64xbf16>, vector<128x64xf32> -> vector<128x64xf32>
    %c0_7 = arith.constant 0 : index
    %c0_8 = arith.constant 0 : index
    %6 = vector.load %arg6[%c0_7, %c0_8] : memref<128x1xf32, #tpu.memory_space<vmem>>, vector<128x1xf32>
    %7 = vector.broadcast %6 : vector<128x1xf32> to vector<128x64xf32>
    %8 = arith.addf %5, %7 : vector<128x64xf32>
    %c0_9 = arith.constant 0 : index
    %c0_10 = arith.constant 0 : index
    %9 = vector.load %arg4[%c0_9, %c0_10] : memref<192x64xbf16, #tpu.memory_space<vmem>>, vector<192x64xbf16>
    %cst_11 = arith.constant dense<0.000000e+00> : vector<192x64xf32>
    %10 = tpu.matmul %9, %3, %cst_11 {dimension_numbers = #tpu.dot_dimension_numbers<[1], [0], [0], [1], [0, 0, 1, 1], [], []>} : vector<192x64xbf16>, vector<64x64xbf16>, vector<192x64xf32> -> vector<192x64xf32>
    %c0_12 = arith.constant 0 : index
    %c0_13 = arith.constant 0 : index
    %11 = vector.load %arg7[%c0_12, %c0_13] : memref<192x1xf32, #tpu.memory_space<vmem>>, vector<192x1xf32>
    %12 = vector.broadcast %11 : vector<192x1xf32> to vector<192x64xf32>
    %13 = arith.addf %10, %12 : vector<192x64xf32>
    %14 = vector.extract_strided_slice %8 {offsets = [0, 0], sizes = [64, 64], strides = [1, 1]} : vector<128x64xf32> to vector<64x64xf32>
    %15 = vector.extract_strided_slice %8 {offsets = [64, 0], sizes = [64, 64], strides = [1, 1]} : vector<128x64xf32> to vector<64x64xf32>
    %16 = vector.extract_strided_slice %13 {offsets = [0, 0], sizes = [64, 64], strides = [1, 1]} : vector<192x64xf32> to vector<64x64xf32>
    %17 = vector.extract_strided_slice %13 {offsets = [64, 0], sizes = [64, 64], strides = [1, 1]} : vector<192x64xf32> to vector<64x64xf32>
    %18 = vector.extract_strided_slice %13 {offsets = [128, 0], sizes = [64, 64], strides = [1, 1]} : vector<192x64xf32> to vector<64x64xf32>
    %19 = arith.truncf %16 : vector<64x64xf32> to vector<64x64xbf16>
    %20 = arith.truncf %14 : vector<64x64xf32> to vector<64x64xbf16>
    %cst_14 = arith.constant dense<0.000000e+00> : vector<64x64xf32>
    %21 = tpu.matmul %19, %20, %cst_14 {dimension_numbers = #tpu.dot_dimension_numbers<[0], [0], [1], [1], [0, 1, 1, 1], [], []>} : vector<64x64xbf16>, vector<64x64xbf16>, vector<64x64xf32> -> vector<64x64xf32>
    %cst_15 = arith.constant dense<0xFF800000> : vector<64xf32>
    %22 = vector.multi_reduction <maximumf>, %21, %cst_15 [0] : vector<64x64xf32> to vector<64xf32>
    %23 = vector.shape_cast %22 : vector<64xf32> to vector<1x64xf32>
    %24 = vector.broadcast %23 : vector<1x64xf32> to vector<64x64xf32>
    %25 = arith.subf %21, %24 : vector<64x64xf32>
    %26 = math.exp %25 : vector<64x64xf32>
    %cst_16 = arith.constant dense<0.000000e+00> : vector<64xf32>
    %27 = vector.multi_reduction <add>, %26, %cst_16 [0] : vector<64x64xf32> to vector<64xf32>
    %28 = vector.shape_cast %27 : vector<64xf32> to vector<1x64xf32>
    %cst_17 = arith.constant 1.000000e+00 : f32
    %29 = vector.broadcast %cst_17 : f32 to vector<1x64xf32>
    %30 = arith.divf %29, %28 : vector<1x64xf32>
    %31 = vector.broadcast %30 : vector<1x64xf32> to vector<64x64xf32>
    %32 = arith.mulf %17, %31 : vector<64x64xf32>
    %33 = arith.truncf %32 : vector<64x64xf32> to vector<64x64xbf16>
    %34 = arith.truncf %26 : vector<64x64xf32> to vector<64x64xbf16>
    %cst_18 = arith.constant dense<0.000000e+00> : vector<64x64xf32>
    %35 = tpu.matmul %33, %34, %cst_18 {dimension_numbers = #tpu.dot_dimension_numbers<[1], [1], [0], [0], [0, 0, 1, 0], [], []>} : vector<64x64xbf16>, vector<64x64xbf16>, vector<64x64xf32> -> vector<64x64xf32>
    %36 = arith.addf %35, %16 : vector<64x64xf32>
    %c0_19 = arith.constant 0 : index
    %c0_20 = arith.constant 0 : index
    %37 = vector.load %arg5[%c0_19, %c0_20] : memref<64x64xbf16, #tpu.memory_space<vmem>>, vector<64x64xbf16>
    %38 = arith.truncf %36 : vector<64x64xf32> to vector<64x64xbf16>
    %cst_21 = arith.constant dense<0.000000e+00> : vector<64x64xf32>
    %39 = tpu.matmul %37, %38, %cst_21 {dimension_numbers = #tpu.dot_dimension_numbers<[1], [0], [0], [1], [0, 0, 1, 1], [], []>} : vector<64x64xbf16>, vector<64x64xbf16>, vector<64x64xf32> -> vector<64x64xf32>
    %c0_22 = arith.constant 0 : index
    %c0_23 = arith.constant 0 : index
    %40 = vector.load %arg8[%c0_22, %c0_23] : memref<64x1xf32, #tpu.memory_space<vmem>>, vector<64x1xf32>
    %41 = vector.broadcast %40 : vector<64x1xf32> to vector<64x64xf32>
    %42 = arith.addf %39, %41 : vector<64x64xf32>
    %43 = arith.truncf %15 : vector<64x64xf32> to vector<64x64xbf16>
    %44 = arith.truncf %42 : vector<64x64xf32> to vector<64x64xbf16>
    %cst_24 = arith.constant dense<0.000000e+00> : vector<64x64xf32>
    %45 = tpu.matmul %43, %44, %cst_24 {dimension_numbers = #tpu.dot_dimension_numbers<[1], [1], [0], [0], [0, 0, 1, 0], [], []>} : vector<64x64xbf16>, vector<64x64xbf16>, vector<64x64xf32> -> vector<64x64xf32>
    %cst_25 = arith.constant dense<0xFF800000> : vector<64xf32>
    %46 = vector.multi_reduction <maximumf>, %45, %cst_25 [1] : vector<64x64xf32> to vector<64xf32>
    %47 = vector.shape_cast %46 : vector<64xf32> to vector<64x1xf32>
    %48 = vector.broadcast %47 : vector<64x1xf32> to vector<64x64xf32>
    %49 = arith.subf %45, %48 : vector<64x64xf32>
    %50 = math.exp %49 : vector<64x64xf32>
    %cst_26 = arith.constant dense<0.000000e+00> : vector<64xf32>
    %51 = vector.multi_reduction <add>, %50, %cst_26 [1] : vector<64x64xf32> to vector<64xf32>
    %52 = vector.shape_cast %51 : vector<64xf32> to vector<64x1xf32>
    %cst_27 = arith.constant 1.000000e+00 : f32
    %53 = vector.broadcast %cst_27 : f32 to vector<64x1xf32>
    %54 = arith.divf %53, %52 : vector<64x1xf32>
    %55 = vector.broadcast %54 : vector<64x1xf32> to vector<64x64xf32>
    %56 = arith.mulf %50, %55 : vector<64x64xf32>
    %57 = arith.truncf %56 : vector<64x64xf32> to vector<64x64xbf16>
    %58 = arith.truncf %18 : vector<64x64xf32> to vector<64x64xbf16>
    %cst_28 = arith.constant dense<0.000000e+00> : vector<64x64xf32>
    %59 = tpu.matmul %57, %58, %cst_28 {dimension_numbers = #tpu.dot_dimension_numbers<[1], [0], [0], [1], [0, 0, 1, 1], [], []>} : vector<64x64xbf16>, vector<64x64xbf16>, vector<64x64xf32> -> vector<64x64xf32>
    %c0_29 = arith.constant 0 : index
    %c0_30 = arith.constant 0 : index
    %c0_31 = arith.constant 0 : index
    %60 = vector.load %arg9[%c0_29, %c0_30, %c0_31] : memref<1x64x64xf32, #tpu.memory_space<vmem>>, vector<1x64x64xf32>
    %61 = vector.shape_cast %60 : vector<1x64x64xf32> to vector<64x64xf32>
    %62 = vector.shape_cast %59 : vector<64x64xf32> to vector<1x64x64xf32>
    tpu.vector_store %arg9[%c0_29, %c0_30, %c0_31], %62 {strides = array<i32>} : memref<1x64x64xf32, #tpu.memory_space<vmem>>, vector<1x64x64xf32>,
    return
  }
  func.func @transform_0(%arg0: i32) -> (i32, i32, i32) {
    %c0_i32 = arith.constant 0 : i32
    %c0_i32_0 = arith.constant 0 : i32
    %c0_i32_1 = arith.constant 0 : i32
    return %arg0, %c0_i32, %c0_i32_0 : i32, i32, i32
  }
  func.func @transform_1(%arg0: i32) -> (i32, i32, i32) {
    %c0_i32 = arith.constant 0 : i32
    %c0_i32_0 = arith.constant 0 : i32
    %c0_i32_1 = arith.constant 0 : i32
    return %arg0, %c0_i32, %c0_i32_0 : i32, i32, i32
  }
  func.func @transform_2(%arg0: i32) -> (i32, i32) {
    %c0_i32 = arith.constant 0 : i32
    %c0_i32_0 = arith.constant 0 : i32
    %c0_i32_1 = arith.constant 0 : i32
    return %c0_i32, %c0_i32_0 : i32, i32
  }
  func.func @transform_3(%arg0: i32) -> (i32, i32) {
    %c0_i32 = arith.constant 0 : i32
    %c0_i32_0 = arith.constant 0 : i32
    %c0_i32_1 = arith.constant 0 : i32
    return %c0_i32, %c0_i32_0 : i32, i32
  }
  func.func @transform_4(%arg0: i32) -> (i32, i32) {
    %c0_i32 = arith.constant 0 : i32
    %c0_i32_0 = arith.constant 0 : i32
    %c0_i32_1 = arith.constant 0 : i32
    return %c0_i32, %c0_i32_0 : i32, i32
  }
  func.func @transform_5(%arg0: i32) -> (i32, i32) {
    %c0_i32 = arith.constant 0 : i32
    %c0_i32_0 = arith.constant 0 : i32
    %c0_i32_1 = arith.constant 0 : i32
    return %c0_i32, %c0_i32_0 : i32, i32
  }
  func.func @transform_6(%arg0: i32) -> (i32, i32) {
    %c0_i32 = arith.constant 0 : i32
    %c0_i32_0 = arith.constant 0 : i32
    %c0_i32_1 = arith.constant 0 : i32
    return %c0_i32, %c0_i32_0 : i32, i32
  }
  func.func @transform_7(%arg0: i32) -> (i32, i32) {
    %c0_i32 = arith.constant 0 : i32
    %c0_i32_0 = arith.constant 0 : i32
    %c0_i32_1 = arith.constant 0 : i32
    return %c0_i32, %c0_i32_0 : i32, i32
  }
  func.func @transform_8(%arg0: i32) -> (i32, i32, i32) {
    %c0_i32 = arith.constant 0 : i32
    %c0_i32_0 = arith.constant 0 : i32
    %c0_i32_1 = arith.constant 0 : i32
    return %arg0, %c0_i32, %c0_i32_0 : i32, i32, i32
  }
}

</mosaic_0001>

<llo_original>
// kernel: tpu_custom_call.1
$region0: #{tpu_custom_call.1}
  #allocation0 [shape = 'u32[]', space=smem, size = 0x4, offset = 0x4, fixed_abs, tag = 'smem constant byte address 0x4 - core index']
  #allocation1 [shape = 'u32[144,128]{1,0:T(1,128)}', space=vmem, size = 0x12000, scoped, tag = 'internal scratch']
  %s0 = inlined_call_operand.vmem [shape: bf16[2,64,64], index: 0, kind: input, shape index: {}]
  %s1 = inlined_call_operand.vmem [shape: bf16[2,64,64], index: 1, kind: input, shape index: {}]
  %s2 = inlined_call_operand.vmem [shape: bf16[128,64], index: 2, kind: input, shape index: {}]
  %s3 = inlined_call_operand.vmem [shape: bf16[192,64], index: 3, kind: input, shape index: {}]
  %s4 = inlined_call_operand.vmem [shape: bf16[64,64], index: 4, kind: input, shape index: {}]
  %s5 = inlined_call_operand.vmem [shape: f32[128,1], index: 5, kind: input, shape index: {}]
  %s6 = inlined_call_operand.vmem [shape: f32[192,1], index: 6, kind: input, shape index: {}]
  %s7 = inlined_call_operand.vmem [shape: f32[64,1], index: 7, kind: input, shape index: {}]
  %s8 = inlined_call_operand.hbm [shape: f32[2,64,64], index: 8, kind: output, shape index: {}]
  %s9 = sld [smem:[#allocation0]]
  $region65: #{tpu_custom_call.1} parent=0
    _
  %s11 = ssub.s32 1, %s9
  %s12 = scalar_select 0, %s11, %s9
  $region1: #{tpu_custom_call.1} parent=0
    #allocation2 [shape = 'u8[65536]{0}', space=vmem, size = 0x10000, scoped, tag = 'output window, operand 0']
    #allocation3 [shape = 's32[2]{0}', space=sflag, size = 0x8, scoped, tag = 'scoped memory for tpu_custom_call.1']
    %13 = vsyncpa [#allocation3], 0
    %s14 = scalar_lea.sflag [#allocation3], 1
    %15 = vsyncpa %s14, 0
    loop: start=0, step=1, limit=4
    $region2: #{tpu_custom_call.1} parent=1 // loop_pre_header
      _
    $region3: #{tpu_custom_call.1} parent=1 // loop_header
      %s17 = sphi 0, %s21
      %p18 = scmp.ge.s32.totalorder %s17, 4
      %s27 = sphi 0, %s29
      %s30 = sphi 0, %s27
      %s31 = sphi 0, %s30
      %s47 = sphi 0, %s31
      %s53 = sphi 0, %s55
      %s56 = sphi 0, %s53
      %s57 = sphi 0, %s56
      %s73 = sphi 0, %s57
      %s77 = sphi 0, %s77
      %s79 = sphi 0, %s77
      %s80 = sphi 0, %s79
      %s94 = sphi 0, %s80
      %s98 = sphi 0, %s98
      %s100 = sphi 0, %s98
      %s101 = sphi 0, %s100
      %s115 = sphi 0, %s101
      %s119 = sphi 0, %s119
      %s121 = sphi 0, %s119
      %s122 = sphi 0, %s121
      %s136 = sphi 0, %s122
      %s140 = sphi 0, %s140
      %s142 = sphi 0, %s140
      %s143 = sphi 0, %s142
      %s157 = sphi 0, %s143
      %s161 = sphi 0, %s161
      %s163 = sphi 0, %s161
      %s164 = sphi 0, %s163
      %s178 = sphi 0, %s164
      %s182 = sphi 0, %s182
      %s184 = sphi 0, %s182
      %s185 = sphi 0, %s184
      %s199 = sphi 0, %s185
      %s205 = sphi 0, %s207
      %s208 = sphi 0, %s205
      %s209 = sphi 0, %s208
      %s225 = sphi 0, %s209
    $region4: #{tpu_custom_call.1} parent=1 // loop_header_branch
      %20 = sbr.rel (%p18) target = $region8
    $region5: #{tpu_custom_call.1} parent=1 // loop_body
      %s22 = ssub.s32 %s17, 1
      %s23 = ssub.s32 %s17, 2
      %s24 = sadd.s32 %s17, 1
      %s25 = ssub.s32 %s17, %s24
      %p26 = scmp.eq.s32.totalorder %s25, 0
      %s28 = sadd.s32 %s27, 1
      %s29 = scalar_select %p26, %s27, %s28
      %p32 = pneg %p26
      %p33 = scmp.eq.s32.totalorder %s17, 1
      %p34 = por %p32, %p33
      %p35 = scmp.ne.s32.totalorder %s27, %s30
      %p36 = scmp.eq.s32.totalorder %s17, 0
      %p37 = por %p35, %p36
      %p38 = scmp.ne.s32.totalorder %s27, %s30
      %p39 = scmp.eq.s32.totalorder %s22, 1
      %p40 = por %p38, %p39
      %p41 = scmp.ne.s32.totalorder %s30, %s31
      %p42 = scmp.eq.s32.totalorder %s22, 0
      %p43 = por %p41, %p42
      %p44 = scmp.ne.s32.totalorder %s30, %s31
      %p45 = scmp.eq.s32.totalorder %s23, 1
      %p46 = por %p44, %p45
      %p48 = scmp.ne.s32.totalorder %s31, %s47
      %p49 = scmp.eq.s32.totalorder %s23, 0
      %p50 = por %p48, %p49
      %s51 = ssub.s32 %s17, %s24
      %p52 = scmp.eq.s32.totalorder %s51, 0
      %s54 = sadd.s32 %s53, 1
      %s55 = scalar_select %p52, %s53, %s54
      %p58 = pneg %p52
      %p59 = scmp.eq.s32.totalorder %s17, 1
      %p60 = por %p58, %p59
      %p61 = scmp.ne.s32.totalorder %s53, %s56
      %p62 = scmp.eq.s32.totalorder %s17, 0
      %p63 = por %p61, %p62
      %p64 = scmp.ne.s32.totalorder %s53, %s56
      %p65 = scmp.eq.s32.totalorder %s22, 1
      %p66 = por %p64, %p65
      %p67 = scmp.ne.s32.totalorder %s56, %s57
      %p68 = scmp.eq.s32.totalorder %s22, 0
      %p69 = por %p67, %p68
      %p70 = scmp.ne.s32.totalorder %s56, %s57
      %p71 = scmp.eq.s32.totalorder %s23, 1
      %p72 = por %p70, %p71
      %p74 = scmp.ne.s32.totalorder %s57, %s73
      %p75 = scmp.eq.s32.totalorder %s23, 0
      %p76 = por %p74, %p75
      %s78 = sadd.s32 %s77, 1
      %p81 = scmp.eq.s32.totalorder %s17, 1
      %p82 = scmp.ne.s32.totalorder %s77, %s79
      %p83 = scmp.eq.s32.totalorder %s17, 0
      %p84 = por %p82, %p83
      %p85 = scmp.ne.s32.totalorder %s77, %s79
      %p86 = scmp.eq.s32.totalorder %s22, 1
      %p87 = por %p85, %p86
      %p88 = scmp.ne.s32.totalorder %s79, %s80
      %p89 = scmp.eq.s32.totalorder %s22, 0
      %p90 = por %p88, %p89
      %p91 = scmp.ne.s32.totalorder %s79, %s80
      %p92 = scmp.eq.s32.totalorder %s23, 1
      %p93 = por %p91, %p92
      %p95 = scmp.ne.s32.totalorder %s80, %s94
      %p96 = scmp.eq.s32.totalorder %s23, 0
      %p97 = por %p95, %p96
      %s99 = sadd.s32 %s98, 1
      %p102 = scmp.eq.s32.totalorder %s17, 1
      %p103 = scmp.ne.s32.totalorder %s98, %s100
      %p104 = scmp.eq.s32.totalorder %s17, 0
      %p105 = por %p103, %p104
      %p106 = scmp.ne.s32.totalorder %s98, %s100
      %p107 = scmp.eq.s32.totalorder %s22, 1
      %p108 = por %p106, %p107
      %p109 = scmp.ne.s32.totalorder %s100, %s101
      %p110 = scmp.eq.s32.totalorder %s22, 0
      %p111 = por %p109, %p110
      %p112 = scmp.ne.s32.totalorder %s100, %s101
      %p113 = scmp.eq.s32.totalorder %s23, 1
      %p114 = por %p112, %p113
      %p116 = scmp.ne.s32.totalorder %s101, %s115
      %p117 = scmp.eq.s32.totalorder %s23, 0
      %p118 = por %p116, %p117
      %s120 = sadd.s32 %s119, 1
      %p123 = scmp.eq.s32.totalorder %s17, 1
      %p124 = scmp.ne.s32.totalorder %s119, %s121
      %p125 = scmp.eq.s32.totalorder %s17, 0
      %p126 = por %p124, %p125
      %p127 = scmp.ne.s32.totalorder %s119, %s121
      %p128 = scmp.eq.s32.totalorder %s22, 1
      %p129 = por %p127, %p128
      %p130 = scmp.ne.s32.totalorder %s121, %s122
      %p131 = scmp.eq.s32.totalorder %s22, 0
      %p132 = por %p130, %p131
      %p133 = scmp.ne.s32.totalorder %s121, %s122
      %p134 = scmp.eq.s32.totalorder %s23, 1
      %p135 = por %p133, %p134
      %p137 = scmp.ne.s32.totalorder %s122, %s136
      %p138 = scmp.eq.s32.totalorder %s23, 0
      %p139 = por %p137, %p138
      %s141 = sadd.s32 %s140, 1
      %p144 = scmp.eq.s32.totalorder %s17, 1
      %p145 = scmp.ne.s32.totalorder %s140, %s142
      %p146 = scmp.eq.s32.totalorder %s17, 0
      %p147 = por %p145, %p146
      %p148 = scmp.ne.s32.totalorder %s140, %s142
      %p149 = scmp.eq.s32.totalorder %s22, 1
      %p150 = por %p148, %p149
      %p151 = scmp.ne.s32.totalorder %s142, %s143
      %p152 = scmp.eq.s32.totalorder %s22, 0
      %p153 = por %p151, %p152
      %p154 = scmp.ne.s32.totalorder %s142, %s143
      %p155 = scmp.eq.s32.totalorder %s23, 1
      %p156 = por %p154, %p155
      %p158 = scmp.ne.s32.totalorder %s143, %s157
      %p159 = scmp.eq.s32.totalorder %s23, 0
      %p160 = por %p158, %p159
      %s162 = sadd.s32 %s161, 1
      %p165 = scmp.eq.s32.totalorder %s17, 1
      %p166 = scmp.ne.s32.totalorder %s161, %s163
      %p167 = scmp.eq.s32.totalorder %s17, 0
      %p168 = por %p166, %p167
      %p169 = scmp.ne.s32.totalorder %s161, %s163
      %p170 = scmp.eq.s32.totalorder %s22, 1
      %p171 = por %p169, %p170
      %p172 = scmp.ne.s32.totalorder %s163, %s164
      %p173 = scmp.eq.s32.totalorder %s22, 0
      %p174 = por %p172, %p173
      %p175 = scmp.ne.s32.totalorder %s163, %s164
      %p176 = scmp.eq.s32.totalorder %s23, 1
      %p177 = por %p175, %p176
      %p179 = scmp.ne.s32.totalorder %s164, %s178
      %p180 = scmp.eq.s32.totalorder %s23, 0
      %p181 = por %p179, %p180
      %s183 = sadd.s32 %s182, 1
      %p186 = scmp.eq.s32.totalorder %s17, 1
      %p187 = scmp.ne.s32.totalorder %s182, %s184
      %p188 = scmp.eq.s32.totalorder %s17, 0
      %p189 = por %p187, %p188
      %p190 = scmp.ne.s32.totalorder %s182, %s184
      %p191 = scmp.eq.s32.totalorder %s22, 1
      %p192 = por %p190, %p191
      %p193 = scmp.ne.s32.totalorder %s184, %s185
      %p194 = scmp.eq.s32.totalorder %s22, 0
      %p195 = por %p193, %p194
      %p196 = scmp.ne.s32.totalorder %s184, %s185
      %p197 = scmp.eq.s32.totalorder %s23, 1
      %p198 = por %p196, %p197
      %p200 = scmp.ne.s32.totalorder %s185, %s199
      %p201 = scmp.eq.s32.totalorder %s23, 0
      %p202 = por %p200, %p201
      %s203 = ssub.s32 %s17, %s24
      %p204 = scmp.eq.s32.totalorder %s203, 0
      %s206 = sadd.s32 %s205, 1
      %s207 = scalar_select %p204, %s205, %s206
      %p210 = pneg %p204
      %p211 = scmp.eq.s32.totalorder %s17, 1
      %p212 = por %p210, %p211
      %p213 = scmp.ne.s32.totalorder %s205, %s208
      %p214 = scmp.eq.s32.totalorder %s17, 0
      %p215 = por %p213, %p214
      %p216 = scmp.ne.s32.totalorder %s205, %s208
      %p217 = scmp.eq.s32.totalorder %s22, 1
      %p218 = por %p216, %p217
      %p219 = scmp.ne.s32.totalorder %s208, %s209
      %p220 = scmp.eq.s32.totalorder %s22, 0
      %p221 = por %p219, %p220
      %p222 = scmp.ne.s32.totalorder %s208, %s209
      %p223 = scmp.eq.s32.totalorder %s23, 1
      %p224 = por %p222, %p223
      %p226 = scmp.ne.s32.totalorder %s209, %s225
      %p227 = scmp.eq.s32.totalorder %s23, 0
      %p228 = por %p226, %p227
      %p229 = scmp.le.s32.totalorder 1, %s17
      %p230 = scmp.lt.s32.totalorder %s17, 3
      %p231 = pnand %p229, %p230
      %p232 = pneg %p231
      // Predicated region
      $region9: #{tpu_custom_call.1} parent=5 // pred_check
        _
      $region10: #{tpu_custom_call.1} parent=5 // pred_check_branch
        %234 = sbr.rel (%p231) target = $region12
      $region11: #{tpu_custom_call.1} parent=5 // pred_region
        %s235 = ssub.s32 %s17, 1
        // Predicated region
        $region13: #{tpu_custom_call.1} parent=11 // pred_check
          %p236 = pneg %p90
        $region14: #{tpu_custom_call.1} parent=11 // pred_check_branch
          %238 = sbr.rel (%p236) target = $region16
        $region15: #{tpu_custom_call.1} parent=11 // pred_region
          _
        $region16: #{tpu_custom_call.1} parent=11 // pred_fallthru
          _
        // Predicated region
        $region17: #{tpu_custom_call.1} parent=11 // pred_check
          %p239 = pneg %p111
        $region18: #{tpu_custom_call.1} parent=11 // pred_check_branch
          %241 = sbr.rel (%p239) target = $region20
        $region19: #{tpu_custom_call.1} parent=11 // pred_region
          _
        $region20: #{tpu_custom_call.1} parent=11 // pred_fallthru
          _
        // Predicated region
        $region21: #{tpu_custom_call.1} parent=11 // pred_check
          %p242 = pneg %p132
        $region22: #{tpu_custom_call.1} parent=11 // pred_check_branch
          %244 = sbr.rel (%p242) target = $region24
        $region23: #{tpu_custom_call.1} parent=11 // pred_region
          _
        $region24: #{tpu_custom_call.1} parent=11 // pred_fallthru
          _
        // Predicated region
        $region25: #{tpu_custom_call.1} parent=11 // pred_check
          %p245 = pneg %p153
        $region26: #{tpu_custom_call.1} parent=11 // pred_check_branch
          %247 = sbr.rel (%p245) target = $region28
        $region27: #{tpu_custom_call.1} parent=11 // pred_region
          _
        $region28: #{tpu_custom_call.1} parent=11 // pred_fallthru
          _
        // Predicated region
        $region29: #{tpu_custom_call.1} parent=11 // pred_check
          %p248 = pneg %p174
        $region30: #{tpu_custom_call.1} parent=11 // pred_check_branch
          %250 = sbr.rel (%p248) target = $region32
        $region31: #{tpu_custom_call.1} parent=11 // pred_region
          _
        $region32: #{tpu_custom_call.1} parent=11 // pred_fallthru
          _
        // Predicated region
        $region33: #{tpu_custom_call.1} parent=11 // pred_check
          %p251 = pneg %p195
        $region34: #{tpu_custom_call.1} parent=11 // pred_check_branch
          %253 = sbr.rel (%p251) target = $region36
        $region35: #{tpu_custom_call.1} parent=11 // pred_region
          _
        $region36: #{tpu_custom_call.1} parent=11 // pred_fallthru
          _
      $region12: #{tpu_custom_call.1} parent=5 // pred_fallthru
        _
      %p254 = scmp.lt.s32.totalorder %s17, 2
      // Predicated region
      $region37: #{tpu_custom_call.1} parent=5 // pred_check
        %p255 = pneg %p254
      $region38: #{tpu_custom_call.1} parent=5 // pred_check_branch
        %257 = sbr.rel (%p255) target = $region40
      $region39: #{tpu_custom_call.1} parent=5 // pred_region
        // Predicated region
        $region41: #{tpu_custom_call.1} parent=39 // pred_check
          %p258 = pneg %p37
        $region42: #{tpu_custom_call.1} parent=39 // pred_check_branch
          %260 = sbr.rel (%p258) target = $region44
        $region43: #{tpu_custom_call.1} parent=39 // pred_region
          %p261 = scmp.lt.s32.totalorder %s17, 1
          %s262 = scalar_select %p261, %s17, 1
          %s263 = smul.addr %s262, 8
          %s264 = smul.addr %s263, 4
          %s265 = scalar_lea.vmem %s0, %s264
        $region44: #{tpu_custom_call.1} parent=39 // pred_fallthru
          _
        // Predicated region
        $region45: #{tpu_custom_call.1} parent=39 // pred_check
          %p266 = pneg %p63
        $region46: #{tpu_custom_call.1} parent=39 // pred_check_branch
          %268 = sbr.rel (%p266) target = $region48
        $region47: #{tpu_custom_call.1} parent=39 // pred_region
          %p269 = scmp.lt.s32.totalorder %s17, 1
          %s270 = scalar_select %p269, %s17, 1
          %s271 = smul.addr %s270, 8
          %s272 = smul.addr %s271, 4
          %s273 = scalar_lea.vmem %s1, %s272
        $region48: #{tpu_custom_call.1} parent=39 // pred_fallthru
          _
      $region40: #{tpu_custom_call.1} parent=5 // pred_fallthru
        _
      %p274 = scmp.le.s32.totalorder 1, %s17
      %p275 = scmp.lt.s32.totalorder %s17, 3
      %p276 = pnand %p274, %p275
      %p277 = pneg %p276
      // Predicated region
      $region49: #{tpu_custom_call.1} parent=5 // pred_check
        _
      $region50: #{tpu_custom_call.1} parent=5 // pred_check_branch
        %279 = sbr.rel (%p276) target = $region52
      $region51: #{tpu_custom_call.1} parent=5 // pred_region
        %s280 = ssub.s32 %s17, 1
        %p281 = scmp.lt.s32.totalorder %s22, 1
        %s282 = scalar_select %p281, %s22, 1
        %s283 = smul.addr %s282, 8
        %s284 = smul.addr %s283, 4
        %s285 = scalar_lea.vmem %s0, %s284
        %p286 = pneg %p43
        %p287 = pneg %p40
        %p288 = scmp.lt.s32.totalorder %s22, 1
        %s289 = scalar_select %p288, %s22, 1
        %s290 = smul.addr %s289, 8
        %s291 = smul.addr %s290, 4
        %s292 = scalar_lea.vmem %s1, %s291
        %p293 = pneg %p69
        %p294 = pneg %p66
        %p295 = pneg %p90
        %p296 = pneg %p87
        %p297 = pneg %p111
        %p298 = pneg %p108
        %p299 = pneg %p132
        %p300 = pneg %p129
        %p301 = pneg %p153
        %p302 = pneg %p150
        %p303 = pneg %p174
        %p304 = pneg %p171
        %p305 = pneg %p195
        %p306 = pneg %p192
        %p307 = pneg %p221
        %p308 = pneg %p218
        %s309 = sand.u32 %s208, 1
        %s310 = scalar_lea.sflag [#allocation3], %s309
        %s311 = sand.u32 %s208, 1
        %s312 = smul.addr %s311, 64
        %s313 = scalar_lea.vmem [#allocation2], %s312
        %p314 = scmp.lt.s32.totalorder %s22, 1
        %s315 = scalar_select %p314, %s22, 1
        %s316 = smul.addr %s315, 8
        %s317 = smul.addr %s316, 4
        %s318 = scalar_lea.vmem %s0, %s317
        %p319 = scmp.lt.s32.totalorder %s22, 1
        %s320 = scalar_select %p319, %s22, 1
        %s321 = smul.addr %s320, 8
        %s322 = smul.addr %s321, 4
        %s323 = scalar_lea.vmem %s1, %s322
        %v325 = vld [vmem:[%s318] sm:$0xf]
        %v326 = vld [vmem:[%s318 + $0x4] sm:$0xf]
        %v327 = vld [vmem:[%s318 + $0x8] sm:$0xf]
        %v328 = vld [vmem:[%s318 + $0xc] sm:$0xf]
        %v329 = vld [vmem:[%s318 + $0x10] sm:$0xf]
        %v330 = vld [vmem:[%s318 + $0x14] sm:$0xf]
        %v331 = vld [vmem:[%s318 + $0x18] sm:$0xf]
        %v332 = vld [vmem:[%s318 + $0x1c] sm:$0xf]
        %v333 = vld [vmem:[%s323] sm:$0xf]
        %v334 = vld [vmem:[%s323 + $0x4] sm:$0xf]
        %v335 = vld [vmem:[%s323 + $0x8] sm:$0xf]
        %v336 = vld [vmem:[%s323 + $0xc] sm:$0xf]
        %v337 = vld [vmem:[%s323 + $0x10] sm:$0xf]
        %v338 = vld [vmem:[%s323 + $0x14] sm:$0xf]
        %v339 = vld [vmem:[%s323 + $0x18] sm:$0xf]
        %v340 = vld [vmem:[%s323 + $0x1c] sm:$0xf]
        %v341 = vld [vmem:[%s2] sm:$0xf]
        %v342 = vld [vmem:[%s2 + $0x4] sm:$0xf]
        %v343 = vld [vmem:[%s2 + $0x8] sm:$0xf]
        %v344 = vld [vmem:[%s2 + $0xc] sm:$0xf]
        %v345 = vld [vmem:[%s2 + $0x10] sm:$0xf]
        %v346 = vld [vmem:[%s2 + $0x14] sm:$0xf]
        %v347 = vld [vmem:[%s2 + $0x18] sm:$0xf]
        %v348 = vld [vmem:[%s2 + $0x1c] sm:$0xf]
        %v349 = vld [vmem:[%s2 + $0x20] sm:$0xf]
        %v350 = vld [vmem:[%s2 + $0x24] sm:$0xf]
        %v351 = vld [vmem:[%s2 + $0x28] sm:$0xf]
        %v352 = vld [vmem:[%s2 + $0x2c] sm:$0xf]
        %v353 = vld [vmem:[%s2 + $0x30] sm:$0xf]
        %v354 = vld [vmem:[%s2 + $0x34] sm:$0xf]
        %v355 = vld [vmem:[%s2 + $0x38] sm:$0xf]
        %v356 = vld [vmem:[%s2 + $0x3c] sm:$0xf]
        %v357 = vld [vmem:[%s5] sm:$0xff]
        %v358 = vld [vmem:[%s5 + $0x8] sm:$0xff]
        %v359 = vld [vmem:[%s5 + $0x10] sm:$0xff]
        %v360 = vld [vmem:[%s5 + $0x18] sm:$0xff]
        %v361 = vld [vmem:[%s5 + $0x20] sm:$0xff]
        %v362 = vld [vmem:[%s5 + $0x28] sm:$0xff]
        %v363 = vld [vmem:[%s5 + $0x30] sm:$0xff]
        %v364 = vld [vmem:[%s5 + $0x38] sm:$0xff]
        %v365 = vld [vmem:[%s5 + $0x40] sm:$0xff]
        %v366 = vld [vmem:[%s5 + $0x48] sm:$0xff]
        %v367 = vld [vmem:[%s5 + $0x50] sm:$0xff]
        %v368 = vld [vmem:[%s5 + $0x58] sm:$0xff]
        %v369 = vld [vmem:[%s5 + $0x60] sm:$0xff]
        %v370 = vld [vmem:[%s5 + $0x68] sm:$0xff]
        %v371 = vld [vmem:[%s5 + $0x70] sm:$0xff]
        %v372 = vld [vmem:[%s5 + $0x78] sm:$0xff]
        %374 = vset.pattern.permute.xlu0 0
        %375 = vperm.xlu0 %374, %v357
        %v376 = vpop.permute.xlu0 %375
        %379 = vset.pattern.permute.xlu0 0
        %380 = vperm.xlu0 %379, %v358
        %v381 = vpop.permute.xlu0 %380
        %384 = vset.pattern.permute.xlu0 0
        %385 = vperm.xlu0 %384, %v359
        %v386 = vpop.permute.xlu0 %385
        %389 = vset.pattern.permute.xlu0 0
        %390 = vperm.xlu0 %389, %v360
        %v391 = vpop.permute.xlu0 %390
        %394 = vset.pattern.permute.xlu0 0
        %395 = vperm.xlu0 %394, %v361
        %v396 = vpop.permute.xlu0 %395
        %399 = vset.pattern.permute.xlu0 0
        %400 = vperm.xlu0 %399, %v362
        %v401 = vpop.permute.xlu0 %400
        %404 = vset.pattern.permute.xlu0 0
        %405 = vperm.xlu0 %404, %v363
        %v406 = vpop.permute.xlu0 %405
        %409 = vset.pattern.permute.xlu0 0
        %410 = vperm.xlu0 %409, %v364
        %v411 = vpop.permute.xlu0 %410
        %414 = vset.pattern.permute.xlu0 0
        %415 = vperm.xlu0 %414, %v365
        %v416 = vpop.permute.xlu0 %415
        %419 = vset.pattern.permute.xlu0 0
        %420 = vperm.xlu0 %419, %v366
        %v421 = vpop.permute.xlu0 %420
        %424 = vset.pattern.permute.xlu0 0
        %425 = vperm.xlu0 %424, %v367
        %v426 = vpop.permute.xlu0 %425
        %429 = vset.pattern.permute.xlu0 0
        %430 = vperm.xlu0 %429, %v368
        %v431 = vpop.permute.xlu0 %430
        %434 = vset.pattern.permute.xlu0 0
        %435 = vperm.xlu0 %434, %v369
        %v436 = vpop.permute.xlu0 %435
        %439 = vset.pattern.permute.xlu0 0
        %440 = vperm.xlu0 %439, %v370
        %v441 = vpop.permute.xlu0 %440
        %444 = vset.pattern.permute.xlu0 0
        %445 = vperm.xlu0 %444, %v371
        %v446 = vpop.permute.xlu0 %445
        %449 = vset.pattern.permute.xlu0 0
        %450 = vperm.xlu0 %449, %v372
        %v451 = vpop.permute.xlu0 %450
        %v469 = vunpack.c.l.b16 %v341
        %v470 = vunpack.c.l.b16 %v342
        %v471 = vunpack.c.l.b16 %v343
        %v472 = vunpack.c.l.b16 %v344
        %v473 = vunpack.c.l.b16 %v345
        %v474 = vunpack.c.l.b16 %v346
        %v475 = vunpack.c.l.b16 %v347
        %v476 = vunpack.c.l.b16 %v348
        %v477 = vunpack.c.l.b16 %v349
        %v478 = vunpack.c.l.b16 %v350
        %v479 = vunpack.c.l.b16 %v351
        %v480 = vunpack.c.l.b16 %v352
        %v481 = vunpack.c.l.b16 %v353
        %v482 = vunpack.c.l.b16 %v354
        %v483 = vunpack.c.l.b16 %v355
        %v484 = vunpack.c.l.b16 %v356
        %v485 = vpack.c.b16 %v470, %v469
        %v486 = vpack.c.b16 %v472, %v471
        %v487 = vpack.c.b16 %v474, %v473
        %v488 = vpack.c.b16 %v476, %v475
        %v489 = vpack.c.b16 %v478, %v477
        %v490 = vpack.c.b16 %v480, %v479
        %v491 = vpack.c.b16 %v482, %v481
        %v492 = vpack.c.b16 %v484, %v483
        %v501 = vunpack.c.l.b16 %v325
        %v502 = vunpack.c.l.b16 %v326
        %v503 = vunpack.c.l.b16 %v327
        %v504 = vunpack.c.l.b16 %v328
        %v505 = vunpack.c.l.b16 %v329
        %v506 = vunpack.c.l.b16 %v330
        %v507 = vunpack.c.l.b16 %v331
        %v508 = vunpack.c.l.b16 %v332
        %v509 = vpack.c.b16 %v502, %v501
        %v510 = vpack.c.b16 %v504, %v503
        %v511 = vpack.c.b16 %v506, %v505
        %v512 = vpack.c.b16 %v508, %v507
        %vm517 = vcmask 523264
        %v519 = vsel %vm517, %v485, 0
        %v522 = vsel %vm517, %v486, 0
        %v525 = vsel %vm517, %v487, 0
        %v528 = vsel %vm517, %v488, 0
        %v531 = vsel %vm517, %v489, 0
        %v534 = vsel %vm517, %v490, 0
        %v537 = vsel %vm517, %v491, 0
        %v540 = vsel %vm517, %v492, 0
        %542 = vmatprep.subr.bf16.mxu0 0
        %543 = vmatpush1.bf16.msra.mxu0 0
        %544 = vmatprep.subr.bf16.mxu0 0
        %545 = vmatpush1.bf16.msra.mxu0 0
        %546 = vmatprep.subr.bf16.mxu0 0
        %547 = vmatpush1.bf16.msra.mxu0 0
        %548 = vmatprep.subr.bf16.mxu0 0
        %549 = vmatpush1.bf16.msra.mxu0 0
        %550 = vmatprep.subr.bf16.mxu0 0
        %551 = vmatpush1.bf16.msra.mxu0 %v512
        %552 = vmatprep.subr.bf16.mxu0 0
        %553 = vmatpush1.bf16.msra.mxu0 %v511
        %554 = vmatprep.subr.bf16.mxu0 0
        %555 = vmatpush1.bf16.msra.mxu0 %v510
        %556 = vmatprep.subr.bf16.mxu0 0
        %557 = vmatpush1.bf16.msra.mxu0 %v509
        %558 = vmatprep.subr.bf16.mxu0 0
        %559 = vmatpush2.bf16.msra.mxu0 0
        %560 = vmatprep.subr.bf16.mxu0 0
        %561 = vmatpush2.bf16.msra.mxu0 0
        %562 = vmatprep.subr.bf16.mxu0 0
        %563 = vmatpush2.bf16.msra.mxu0 0
        %564 = vmatprep.subr.bf16.mxu0 0
        %565 = vmatpush2.bf16.msra.mxu0 0
        %566 = vmatprep.subr.bf16.mxu0 0
        %567 = vmatpush2.bf16.msra.mxu0 0
        %568 = vmatprep.subr.bf16.mxu0 0
        %569 = vmatpush2.bf16.msra.mxu0 0
        %570 = vmatprep.subr.bf16.mxu0 0
        %571 = vmatpush2.bf16.msra.mxu0 0
        %572 = vmatprep.subr.bf16.mxu0 0
        %573 = vmatpush2.bf16.msra.mxu0 0
        %574 = vmatprep.mubr.bf16.mxu0 0
        %575 = vmatmul.mubr.bf16.gmra.mxu0 %v519
        %v576 = vpop.f32.mrf.mxu0
        %v577 = vadd.f32 %v376, %v576
        %v578 = vpop.f32.mrf.mxu0
        %v579 = vpop.f32.mrf.mxu0
        %v580 = vadd.f32 %v381, %v579
        %v581 = vpop.f32.mrf.mxu0
        %582 = vmatprep.mubr.bf16.mxu0 0
        %583 = vmatmul.mubr.bf16.gmra.mxu0 %v522
        %v584 = vpop.f32.mrf.mxu0
        %v585 = vadd.f32 %v386, %v584
        %v586 = vpop.f32.mrf.mxu0
        %v587 = vpop.f32.mrf.mxu0
        %v588 = vadd.f32 %v391, %v587
        %v589 = vpop.f32.mrf.mxu0
        %590 = vmatprep.mubr.bf16.mxu0 0
        %591 = vmatmul.mubr.bf16.gmra.mxu0 %v525
        %v592 = vpop.f32.mrf.mxu0
        %v593 = vadd.f32 %v396, %v592
        %v594 = vpop.f32.mrf.mxu0
        %v595 = vpop.f32.mrf.mxu0
        %v596 = vadd.f32 %v401, %v595
        %v597 = vpop.f32.mrf.mxu0
        %598 = vmatprep.mubr.bf16.mxu0 0
        %599 = vmatmul.mubr.bf16.gmra.mxu0 %v528
        %v600 = vpop.f32.mrf.mxu0
        %v601 = vadd.f32 %v406, %v600
        %v602 = vpop.f32.mrf.mxu0
        %v603 = vpop.f32.mrf.mxu0
        %v604 = vadd.f32 %v411, %v603
        %v605 = vpop.f32.mrf.mxu0
        %606 = vmatprep.mubr.bf16.mxu0 0
        %607 = vmatmul.mubr.bf16.gmra.mxu0 %v531
        %v608 = vpop.f32.mrf.mxu0
        %v609 = vadd.f32 %v416, %v608
        %v610 = vpop.f32.mrf.mxu0
        %v611 = vpop.f32.mrf.mxu0
        %v612 = vadd.f32 %v421, %v611
        %v613 = vpop.f32.mrf.mxu0
        %614 = vmatprep.mubr.bf16.mxu0 0
        %615 = vmatmul.mubr.bf16.gmra.mxu0 %v534
        %v616 = vpop.f32.mrf.mxu0
        %v617 = vadd.f32 %v426, %v616
        %v618 = vpop.f32.mrf.mxu0
        %v619 = vpop.f32.mrf.mxu0
        %v620 = vadd.f32 %v431, %v619
        %v621 = vpop.f32.mrf.mxu0
        %622 = vmatprep.mubr.bf16.mxu0 0
        %623 = vmatmul.mubr.bf16.gmra.mxu0 %v537
        %v624 = vpop.f32.mrf.mxu0
        %v625 = vadd.f32 %v436, %v624
        %v626 = vpop.f32.mrf.mxu0
        %v627 = vpop.f32.mrf.mxu0
        %v628 = vadd.f32 %v441, %v627
        %v629 = vpop.f32.mrf.mxu0
        %630 = vmatprep.mubr.bf16.mxu0 0
        %631 = vmatmul.mubr.bf16.gmra.mxu0 %v540
        %v632 = vpop.f32.mrf.mxu0
        %v633 = vadd.f32 %v446, %v632
        %v634 = vpop.f32.mrf.mxu0
        %v635 = vpop.f32.mrf.mxu0
        %v636 = vadd.f32 %v451, %v635
        %v637 = vpop.f32.mrf.mxu0
        %638 = vdwg.mxu0
        %v639 = vld [vmem:[%s3] sm:$0xf]
        %v640 = vld [vmem:[%s3 + $0x4] sm:$0xf]
        %v641 = vld [vmem:[%s3 + $0x8] sm:$0xf]
        %v642 = vld [vmem:[%s3 + $0xc] sm:$0xf]
        %v643 = vld [vmem:[%s3 + $0x10] sm:$0xf]
        %v644 = vld [vmem:[%s3 + $0x14] sm:$0xf]
        %v645 = vld [vmem:[%s3 + $0x18] sm:$0xf]
        %v646 = vld [vmem:[%s3 + $0x1c] sm:$0xf]
        %v647 = vld [vmem:[%s3 + $0x20] sm:$0xf]
        %v648 = vld [vmem:[%s3 + $0x24] sm:$0xf]
        %v649 = vld [vmem:[%s3 + $0x28] sm:$0xf]
        %v650 = vld [vmem:[%s3 + $0x2c] sm:$0xf]
        %v651 = vld [vmem:[%s3 + $0x30] sm:$0xf]
        %v652 = vld [vmem:[%s3 + $0x34] sm:$0xf]
        %v653 = vld [vmem:[%s3 + $0x38] sm:$0xf]
        %v654 = vld [vmem:[%s3 + $0x3c] sm:$0xf]
        %v655 = vld [vmem:[%s3 + $0x40] sm:$0xf]
        %v656 = vld [vmem:[%s3 + $0x44] sm:$0xf]
        %v657 = vld [vmem:[%s3 + $0x48] sm:$0xf]
        %v658 = vld [vmem:[%s3 + $0x4c] sm:$0xf]
        %v659 = vld [vmem:[%s3 + $0x50] sm:$0xf]
        %v660 = vld [vmem:[%s3 + $0x54] sm:$0xf]
        %v661 = vld [vmem:[%s3 + $0x58] sm:$0xf]
        %v662 = vld [vmem:[%s3 + $0x5c] sm:$0xf]
        %v663 = vld [vmem:[%s6] sm:$0xff]
        %v664 = vld [vmem:[%s6 + $0x8] sm:$0xff]
        %v665 = vld [vmem:[%s6 + $0x10] sm:$0xff]
        %v666 = vld [vmem:[%s6 + $0x18] sm:$0xff]
        %v667 = vld [vmem:[%s6 + $0x20] sm:$0xff]
        %v668 = vld [vmem:[%s6 + $0x28] sm:$0xff]
        %v669 = vld [vmem:[%s6 + $0x30] sm:$0xff]
        %v670 = vld [vmem:[%s6 + $0x38] sm:$0xff]
        %v671 = vld [vmem:[%s6 + $0x40] sm:$0xff]
        %v672 = vld [vmem:[%s6 + $0x48] sm:$0xff]
        %v673 = vld [vmem:[%s6 + $0x50] sm:$0xff]
        %v674 = vld [vmem:[%s6 + $0x58] sm:$0xff]
        %v675 = vld [vmem:[%s6 + $0x60] sm:$0xff]
        %v676 = vld [vmem:[%s6 + $0x68] sm:$0xff]
        %v677 = vld [vmem:[%s6 + $0x70] sm:$0xff]
        %v678 = vld [vmem:[%s6 + $0x78] sm:$0xff]
        %v679 = vld [vmem:[%s6 + $0x80] sm:$0xff]
        %v680 = vld [vmem:[%s6 + $0x88] sm:$0xff]
        %v681 = vld [vmem:[%s6 + $0x90] sm:$0xff]
        %v682 = vld [vmem:[%s6 + $0x98] sm:$0xff]
        %v683 = vld [vmem:[%s6 + $0xa0] sm:$0xff]
        %v684 = vld [vmem:[%s6 + $0xa8] sm:$0xff]
        %v685 = vld [vmem:[%s6 + $0xb0] sm:$0xff]
        %v686 = vld [vmem:[%s6 + $0xb8] sm:$0xff]
        %688 = vset.pattern.permute.xlu0 0
        %689 = vperm.xlu0 %688, %v663
        %v690 = vpop.permute.xlu0 %689
        %693 = vset.pattern.permute.xlu0 0
        %694 = vperm.xlu0 %693, %v664
        %v695 = vpop.permute.xlu0 %694
        %698 = vset.pattern.permute.xlu0 0
        %699 = vperm.xlu0 %698, %v665
        %v700 = vpop.permute.xlu0 %699
        %703 = vset.pattern.permute.xlu0 0
        %704 = vperm.xlu0 %703, %v666
        %v705 = vpop.permute.xlu0 %704
        %708 = vset.pattern.permute.xlu0 0
        %709 = vperm.xlu0 %708, %v667
        %v710 = vpop.permute.xlu0 %709
        %713 = vset.pattern.permute.xlu0 0
        %714 = vperm.xlu0 %713, %v668
        %v715 = vpop.permute.xlu0 %714
        %718 = vset.pattern.permute.xlu0 0
        %719 = vperm.xlu0 %718, %v669
        %v720 = vpop.permute.xlu0 %719
        %723 = vset.pattern.permute.xlu0 0
        %724 = vperm.xlu0 %723, %v670
        %v725 = vpop.permute.xlu0 %724
        %728 = vset.pattern.permute.xlu0 0
        %729 = vperm.xlu0 %728, %v671
        %v730 = vpop.permute.xlu0 %729
        %733 = vset.pattern.permute.xlu0 0
        %734 = vperm.xlu0 %733, %v672
        %v735 = vpop.permute.xlu0 %734
        %738 = vset.pattern.permute.xlu0 0
        %739 = vperm.xlu0 %738, %v673
        %v740 = vpop.permute.xlu0 %739
        %743 = vset.pattern.permute.xlu0 0
        %744 = vperm.xlu0 %743, %v674
        %v745 = vpop.permute.xlu0 %744
        %748 = vset.pattern.permute.xlu0 0
        %749 = vperm.xlu0 %748, %v675
        %v750 = vpop.permute.xlu0 %749
        %753 = vset.pattern.permute.xlu0 0
        %754 = vperm.xlu0 %753, %v676
        %v755 = vpop.permute.xlu0 %754
        %758 = vset.pattern.permute.xlu0 0
        %759 = vperm.xlu0 %758, %v677
        %v760 = vpop.permute.xlu0 %759
        %763 = vset.pattern.permute.xlu0 0
        %764 = vperm.xlu0 %763, %v678
        %v765 = vpop.permute.xlu0 %764
        %768 = vset.pattern.permute.xlu0 0
        %769 = vperm.xlu0 %768, %v679
        %v770 = vpop.permute.xlu0 %769
        %773 = vset.pattern.permute.xlu0 0
        %774 = vperm.xlu0 %773, %v680
        %v775 = vpop.permute.xlu0 %774
        %778 = vset.pattern.permute.xlu0 0
        %779 = vperm.xlu0 %778, %v681
        %v780 = vpop.permute.xlu0 %779
        %783 = vset.pattern.permute.xlu0 0
        %784 = vperm.xlu0 %783, %v682
        %v785 = vpop.permute.xlu0 %784
        %788 = vset.pattern.permute.xlu0 0
        %789 = vperm.xlu0 %788, %v683
        %v790 = vpop.permute.xlu0 %789
        %793 = vset.pattern.permute.xlu0 0
        %794 = vperm.xlu0 %793, %v684
        %v795 = vpop.permute.xlu0 %794
        %798 = vset.pattern.permute.xlu0 0
        %799 = vperm.xlu0 %798, %v685
        %v800 = vpop.permute.xlu0 %799
        %803 = vset.pattern.permute.xlu0 0
        %804 = vperm.xlu0 %803, %v686
        %v805 = vpop.permute.xlu0 %804
        %v831 = vunpack.c.l.b16 %v639
        %v832 = vunpack.c.l.b16 %v640
        %v833 = vunpack.c.l.b16 %v641
        %v834 = vunpack.c.l.b16 %v642
        %v835 = vunpack.c.l.b16 %v643
        %v836 = vunpack.c.l.b16 %v644
        %v837 = vunpack.c.l.b16 %v645
        %v838 = vunpack.c.l.b16 %v646
        %v839 = vunpack.c.l.b16 %v647
        %v840 = vunpack.c.l.b16 %v648
        %v841 = vunpack.c.l.b16 %v649
        %v842 = vunpack.c.l.b16 %v650
        %v843 = vunpack.c.l.b16 %v651
        %v844 = vunpack.c.l.b16 %v652
        %v845 = vunpack.c.l.b16 %v653
        %v846 = vunpack.c.l.b16 %v654
        %v847 = vunpack.c.l.b16 %v655
        %v848 = vunpack.c.l.b16 %v656
        %v849 = vunpack.c.l.b16 %v657
        %v850 = vunpack.c.l.b16 %v658
        %v851 = vunpack.c.l.b16 %v659
        %v852 = vunpack.c.l.b16 %v660
        %v853 = vunpack.c.l.b16 %v661
        %v854 = vunpack.c.l.b16 %v662
        %v855 = vpack.c.b16 %v832, %v831
        %v856 = vpack.c.b16 %v834, %v833
        %v857 = vpack.c.b16 %v836, %v835
        %v858 = vpack.c.b16 %v838, %v837
        %v859 = vpack.c.b16 %v840, %v839
        %v860 = vpack.c.b16 %v842, %v841
        %v861 = vpack.c.b16 %v844, %v843
        %v862 = vpack.c.b16 %v846, %v845
        %v863 = vpack.c.b16 %v848, %v847
        %v864 = vpack.c.b16 %v850, %v849
        %v865 = vpack.c.b16 %v852, %v851
        %v866 = vpack.c.b16 %v854, %v853
        %v875 = vunpack.c.l.b16 %v333
        %v876 = vunpack.c.l.b16 %v334
        %v877 = vunpack.c.l.b16 %v335
        %v878 = vunpack.c.l.b16 %v336
        %v879 = vunpack.c.l.b16 %v337
        %v880 = vunpack.c.l.b16 %v338
        %v881 = vunpack.c.l.b16 %v339
        %v882 = vunpack.c.l.b16 %v340
        %v883 = vpack.c.b16 %v876, %v875
        %v884 = vpack.c.b16 %v878, %v877
        %v885 = vpack.c.b16 %v880, %v879
        %v886 = vpack.c.b16 %v882, %v881
        %v892 = vsel %vm517, %v855, 0
        %v895 = vsel %vm517, %v856, 0
        %v898 = vsel %vm517, %v857, 0
        %v901 = vsel %vm517, %v858, 0
        %v904 = vsel %vm517, %v859, 0
        %v907 = vsel %vm517, %v860, 0
        %v910 = vsel %vm517, %v861, 0
        %v913 = vsel %vm517, %v862, 0
        %v916 = vsel %vm517, %v863, 0
        %v919 = vsel %vm517, %v864, 0
        %v922 = vsel %vm517, %v865, 0
        %v925 = vsel %vm517, %v866, 0
        %927 = vmatprep.subr.bf16.mxu0 0
        %928 = vmatpush1.bf16.msra.mxu0 0
        %929 = vmatprep.subr.bf16.mxu0 0
        %930 = vmatpush1.bf16.msra.mxu0 0
        %931 = vmatprep.subr.bf16.mxu0 0
        %932 = vmatpush1.bf16.msra.mxu0 0
        %933 = vmatprep.subr.bf16.mxu0 0
        %934 = vmatpush1.bf16.msra.mxu0 0
        %935 = vmatprep.subr.bf16.mxu0 0
        %936 = vmatpush1.bf16.msra.mxu0 %v886
        %937 = vmatprep.subr.bf16.mxu0 0
        %938 = vmatpush1.bf16.msra.mxu0 %v885
        %939 = vmatprep.subr.bf16.mxu0 0
        %940 = vmatpush1.bf16.msra.mxu0 %v884
        %941 = vmatprep.subr.bf16.mxu0 0
        %942 = vmatpush1.bf16.msra.mxu0 %v883
        %943 = vmatprep.subr.bf16.mxu0 0
        %944 = vmatpush2.bf16.msra.mxu0 0
        %945 = vmatprep.subr.bf16.mxu0 0
        %946 = vmatpush2.bf16.msra.mxu0 0
        %947 = vmatprep.subr.bf16.mxu0 0
        %948 = vmatpush2.bf16.msra.mxu0 0
        %949 = vmatprep.subr.bf16.mxu0 0
        %950 = vmatpush2.bf16.msra.mxu0 0
        %951 = vmatprep.subr.bf16.mxu0 0
        %952 = vmatpush2.bf16.msra.mxu0 0
        %953 = vmatprep.subr.bf16.mxu0 0
        %954 = vmatpush2.bf16.msra.mxu0 0
        %955 = vmatprep.subr.bf16.mxu0 0
        %956 = vmatpush2.bf16.msra.mxu0 0
        %957 = vmatprep.subr.bf16.mxu0 0
        %958 = vmatpush2.bf16.msra.mxu0 0
        %959 = vmatprep.mubr.bf16.mxu0 0
        %960 = vmatmul.mubr.bf16.gmra.mxu0 %v892
        %v961 = vpop.f32.mrf.mxu0
        %v962 = vadd.f32 %v690, %v961
        %v963 = vpop.f32.mrf.mxu0
        %v964 = vpop.f32.mrf.mxu0
        %v965 = vadd.f32 %v695, %v964
        %v966 = vpop.f32.mrf.mxu0
        %967 = vmatprep.mubr.bf16.mxu0 0
        %968 = vmatmul.mubr.bf16.gmra.mxu0 %v895
        %v969 = vpop.f32.mrf.mxu0
        %v970 = vadd.f32 %v700, %v969
        %v971 = vpop.f32.mrf.mxu0
        %v972 = vpop.f32.mrf.mxu0
        %v973 = vadd.f32 %v705, %v972
        %v974 = vpop.f32.mrf.mxu0
        %975 = vmatprep.mubr.bf16.mxu0 0
        %976 = vmatmul.mubr.bf16.gmra.mxu0 %v898
        %v977 = vpop.f32.mrf.mxu0
        %v978 = vadd.f32 %v710, %v977
        %v979 = vpop.f32.mrf.mxu0
        %v980 = vpop.f32.mrf.mxu0
        %v981 = vadd.f32 %v715, %v980
        %v982 = vpop.f32.mrf.mxu0
        %983 = vmatprep.mubr.bf16.mxu0 0
        %984 = vmatmul.mubr.bf16.gmra.mxu0 %v901
        %v985 = vpop.f32.mrf.mxu0
        %v986 = vadd.f32 %v720, %v985
        %v987 = vpop.f32.mrf.mxu0
        %v988 = vpop.f32.mrf.mxu0
        %v989 = vadd.f32 %v725, %v988
        %v990 = vpop.f32.mrf.mxu0
        %991 = vmatprep.mubr.bf16.mxu0 0
        %992 = vmatmul.mubr.bf16.gmra.mxu0 %v904
        %v993 = vpop.f32.mrf.mxu0
        %v994 = vadd.f32 %v730, %v993
        %v995 = vpop.f32.mrf.mxu0
        %v996 = vpop.f32.mrf.mxu0
        %v997 = vadd.f32 %v735, %v996
        %v998 = vpop.f32.mrf.mxu0
        %999 = vmatprep.mubr.bf16.mxu0 0
        %1000 = vmatmul.mubr.bf16.gmra.mxu0 %v907
        %v1001 = vpop.f32.mrf.mxu0
        %v1002 = vadd.f32 %v740, %v1001
        %v1003 = vpop.f32.mrf.mxu0
        %v1004 = vpop.f32.mrf.mxu0
        %v1005 = vadd.f32 %v745, %v1004
        %v1006 = vpop.f32.mrf.mxu0
        %1007 = vmatprep.mubr.bf16.mxu0 0
        %1008 = vmatmul.mubr.bf16.gmra.mxu0 %v910
        %v1009 = vpop.f32.mrf.mxu0
        %v1010 = vadd.f32 %v750, %v1009
        %v1011 = vpop.f32.mrf.mxu0
        %v1012 = vpop.f32.mrf.mxu0
        %v1013 = vadd.f32 %v755, %v1012
        %v1014 = vpop.f32.mrf.mxu0
        %1015 = vmatprep.mubr.bf16.mxu0 0
        %1016 = vmatmul.mubr.bf16.gmra.mxu0 %v913
        %v1017 = vpop.f32.mrf.mxu0
        %v1018 = vadd.f32 %v760, %v1017
        %v1019 = vpop.f32.mrf.mxu0
        %v1020 = vpop.f32.mrf.mxu0
        %v1021 = vadd.f32 %v765, %v1020
        %v1022 = vpop.f32.mrf.mxu0
        %1023 = vmatprep.mubr.bf16.mxu0 0
        %1024 = vmatmul.mubr.bf16.gmra.mxu0 %v916
        %v1025 = vpop.f32.mrf.mxu0
        %v1026 = vadd.f32 %v770, %v1025
        %v1027 = vpop.f32.mrf.mxu0
        %v1028 = vpop.f32.mrf.mxu0
        %v1029 = vadd.f32 %v775, %v1028
        %v1030 = vpop.f32.mrf.mxu0
        %1031 = vmatprep.mubr.bf16.mxu0 0
        %1032 = vmatmul.mubr.bf16.gmra.mxu0 %v919
        %v1033 = vpop.f32.mrf.mxu0
        %v1034 = vadd.f32 %v780, %v1033
        %v1035 = vpop.f32.mrf.mxu0
        %v1036 = vpop.f32.mrf.mxu0
        %v1037 = vadd.f32 %v785, %v1036
        %v1038 = vpop.f32.mrf.mxu0
        %1039 = vmatprep.mubr.bf16.mxu0 0
        %1040 = vmatmul.mubr.bf16.gmra.mxu0 %v922
        %v1041 = vpop.f32.mrf.mxu0
        %v1042 = vadd.f32 %v790, %v1041
        %v1043 = vpop.f32.mrf.mxu0
        %v1044 = vpop.f32.mrf.mxu0
        %v1045 = vadd.f32 %v795, %v1044
        %v1046 = vpop.f32.mrf.mxu0
        %1047 = vmatprep.mubr.bf16.mxu0 0
        %1048 = vmatmul.mubr.bf16.gmra.mxu0 %v925
        %v1049 = vpop.f32.mrf.mxu0
        %v1050 = vadd.f32 %v800, %v1049
        %v1051 = vpop.f32.mrf.mxu0
        %v1052 = vpop.f32.mrf.mxu0
        %v1053 = vadd.f32 %v805, %v1052
        %v1054 = vpop.f32.mrf.mxu0
        %1055 = vdwg.mxu0
        %v1056 = vpack.c.bf16 %v965, %v962
        %v1057 = vpack.c.bf16 %v973, %v970
        %v1058 = vpack.c.bf16 %v981, %v978
        %v1059 = vpack.c.bf16 %v989, %v986
        %v1060 = vpack.c.bf16 %v580, %v577
        %v1061 = vpack.c.bf16 %v588, %v585
        %v1062 = vpack.c.bf16 %v596, %v593
        %v1063 = vpack.c.bf16 %v604, %v601
        %1064 = vxpose.xlu0.c.b16.start [1/8] %v1056, 128
        %1065 = vxpose.xlu0.c.b16.cont [2/8] %v1057, 128
        %1066 = vxpose.xlu0.c.b16.cont [3/8] %v1058, 128
        %1067 = vxpose.xlu0.c.b16.cont [4/8] %v1059, 128
        %1068 = vxpose.xlu0.c.b16.cont [5/8] 0, 128
        %1069 = vxpose.xlu0.c.b16.cont [6/8] 0, 128
        %1070 = vxpose.xlu0.c.b16.cont [7/8] 0, 128
        %1071 = vxpose.xlu0.c.b16.end [8/8] 0, 128
        %v1072 = vpop.trf.xlu0
        %v1073 = vpop.trf.xlu0
        %v1074 = vpop.trf.xlu0
        %v1075 = vpop.trf.xlu0
        %v1076 = vpop.trf.xlu0
        %v1077 = vpop.trf.xlu0
        %v1078 = vpop.trf.xlu0
        %v1079 = vpop.trf.xlu0
        %v1081 = vsel %vm517, %v1072, 0
        %v1084 = vsel %vm517, %v1073, 0
        %v1087 = vsel %vm517, %v1074, 0
        %v1090 = vsel %vm517, %v1075, 0
        %1092 = vmatprep.subr.bf16.mxu0 0
        %1093 = vmatpush1.bf16.msra.mxu0 0
        %1094 = vmatprep.subr.bf16.mxu0 0
        %1095 = vmatpush1.bf16.msra.mxu0 0
        %1096 = vmatprep.subr.bf16.mxu0 0
        %1097 = vmatpush1.bf16.msra.mxu0 0
        %1098 = vmatprep.subr.bf16.mxu0 0
        %1099 = vmatpush1.bf16.msra.mxu0 0
        %1100 = vmatprep.subr.bf16.mxu0 0
        %1101 = vmatpush1.bf16.msra.mxu0 %v1063
        %1102 = vmatprep.subr.bf16.mxu0 0
        %1103 = vmatpush1.bf16.msra.mxu0 %v1062
        %1104 = vmatprep.subr.bf16.mxu0 0
        %1105 = vmatpush1.bf16.msra.mxu0 %v1061
        %1106 = vmatprep.subr.bf16.mxu0 0
        %1107 = vmatpush1.bf16.msra.mxu0 %v1060
        %1108 = vmatprep.subr.bf16.mxu0 0
        %1109 = vmatpush2.bf16.msra.mxu0 0
        %1110 = vmatprep.subr.bf16.mxu0 0
        %1111 = vmatpush2.bf16.msra.mxu0 0
        %1112 = vmatprep.subr.bf16.mxu0 0
        %1113 = vmatpush2.bf16.msra.mxu0 0
        %1114 = vmatprep.subr.bf16.mxu0 0
        %1115 = vmatpush2.bf16.msra.mxu0 0
        %1116 = vmatprep.subr.bf16.mxu0 0
        %1117 = vmatpush2.bf16.msra.mxu0 0
        %1118 = vmatprep.subr.bf16.mxu0 0
        %1119 = vmatpush2.bf16.msra.mxu0 0
        %1120 = vmatprep.subr.bf16.mxu0 0
        %1121 = vmatpush2.bf16.msra.mxu0 0
        %1122 = vmatprep.subr.bf16.mxu0 0
        %1123 = vmatpush2.bf16.msra.mxu0 0
        %1124 = vmatprep.mubr.bf16.mxu0 0
        %1125 = vmatmul.mubr.bf16.gmra.mxu0 %v1081
        %v1126 = vpop.f32.mrf.mxu0
        %v1127 = vadd.f32 0.0, %v1126
        %v1128 = vpop.f32.mrf.mxu0
        %v1129 = vpop.f32.mrf.mxu0
        %v1130 = vadd.f32 0.0, %v1129
        %v1131 = vpop.f32.mrf.mxu0
        %1132 = vmatprep.mubr.bf16.mxu0 0
        %1133 = vmatmul.mubr.bf16.gmra.mxu0 %v1084
        %v1134 = vpop.f32.mrf.mxu0
        %v1135 = vadd.f32 0.0, %v1134
        %v1136 = vpop.f32.mrf.mxu0
        %v1137 = vpop.f32.mrf.mxu0
        %v1138 = vadd.f32 0.0, %v1137
        %v1139 = vpop.f32.mrf.mxu0
        %1140 = vmatprep.mubr.bf16.mxu0 0
        %1141 = vmatmul.mubr.bf16.gmra.mxu0 %v1087
        %v1142 = vpop.f32.mrf.mxu0
        %v1143 = vadd.f32 0.0, %v1142
        %v1144 = vpop.f32.mrf.mxu0
        %v1145 = vpop.f32.mrf.mxu0
        %v1146 = vadd.f32 0.0, %v1145
        %v1147 = vpop.f32.mrf.mxu0
        %1148 = vmatprep.mubr.bf16.mxu0 0
        %1149 = vmatmul.mubr.bf16.gmra.mxu0 %v1090
        %v1150 = vpop.f32.mrf.mxu0
        %v1151 = vadd.f32 0.0, %v1150
        %v1152 = vpop.f32.mrf.mxu0
        %v1153 = vpop.f32.mrf.mxu0
        %v1154 = vadd.f32 0.0, %v1153
        %v1155 = vpop.f32.mrf.mxu0
        %1156 = vdwg.mxu0
        %v1157 = vsel %vm517, %v1127, -inf
        %v1158 = vsel %vm517, %v1130, -inf
        %v1159 = vsel %vm517, %v1135, -inf
        %v1160 = vsel %vm517, %v1138, -inf
        %v1161 = vsel %vm517, %v1143, -inf
        %v1162 = vmax.f32 %v1157, %v1161
        %v1163 = vsel %vm517, %v1146, -inf
        %v1164 = vmax.f32 %v1158, %v1163
        %v1165 = vsel %vm517, %v1151, -inf
        %v1166 = vmax.f32 %v1159, %v1165
        %v1167 = vsel %vm517, %v1154, -inf
        %v1168 = vmax.f32 %v1160, %v1167
        %v1169 = vmax.f32 %v1162, %v1164
        %v1170 = vmax.f32 %v1166, %v1168
        %v1171 = vmax.f32 %v1169, %v1170
        %v1172 = vrot.slane %v1171, 4
        %v1173 = vmax.f32 %v1171, %v1172
        %v1174 = vrot.slane %v1173, 2
        %v1175 = vmax.f32 %v1173, %v1174
        %v1176 = vrot.slane %v1175, 1
        %v1177 = vmax.f32 %v1175, %v1176
        %v1178 = vsub.f32 %v1127, %v1177
        %v1179 = vsub.f32 %v1130, %v1177
        %v1180 = vsub.f32 %v1135, %v1177
        %v1181 = vsub.f32 %v1138, %v1177
        %v1182 = vsub.f32 %v1143, %v1177
        %v1183 = vsub.f32 %v1146, %v1177
        %v1184 = vsub.f32 %v1151, %v1177
        %v1185 = vsub.f32 %v1154, %v1177
        %v1186 = vmul.f32 %v1178, 1.442695
        %v1187 = vpow.pop %v1186
        %v1188 = vmul.f32 %v1179, 1.442695
        %v1189 = vpow.pop %v1188
        %v1190 = vmul.f32 %v1180, 1.442695
        %v1191 = vpow.pop %v1190
        %v1192 = vmul.f32 %v1181, 1.442695
        %v1193 = vpow.pop %v1192
        %v1194 = vmul.f32 %v1182, 1.442695
        %v1195 = vpow.pop %v1194
        %v1196 = vmul.f32 %v1183, 1.442695
        %v1197 = vpow.pop %v1196
        %v1198 = vmul.f32 %v1184, 1.442695
        %v1199 = vpow.pop %v1198
        %v1200 = vmul.f32 %v1185, 1.442695
        %v1201 = vpow.pop %v1200
        %v1202 = vsel %vm517, %v1187, 0.0
        %v1203 = vsel %vm517, %v1189, 0.0
        %v1204 = vadd.f32 %v1202, %v1203
        %v1205 = vsel %vm517, %v1191, 0.0
        %v1206 = vadd.f32 %v1204, %v1205
        %v1207 = vsel %vm517, %v1193, 0.0
        %v1208 = vadd.f32 %v1206, %v1207
        %v1209 = vsel %vm517, %v1195, 0.0
        %v1210 = vadd.f32 %v1208, %v1209
        %v1211 = vsel %vm517, %v1197, 0.0
        %v1212 = vadd.f32 %v1210, %v1211
        %v1213 = vsel %vm517, %v1199, 0.0
        %v1214 = vadd.f32 %v1212, %v1213
        %v1215 = vsel %vm517, %v1201, 0.0
        %v1216 = vadd.f32 %v1214, %v1215
        %v1217 = vrot.slane %v1216, 4
        %v1218 = vadd.f32 %v1216, %v1217
        %v1219 = vrot.slane %v1218, 2
        %v1220 = vadd.f32 %v1218, %v1219
        %v1221 = vrot.slane %v1220, 1
        %v1222 = vadd.f32 %v1220, %v1221
        %v1223 = vrcp.pop %v1222
        %v1224 = vmul.f32 1.0, %v1223
        %v1225 = vmul.f32 %v994, %v1224
        %v1226 = vmul.f32 %v997, %v1224
        %v1227 = vmul.f32 %v1002, %v1224
        %v1228 = vmul.f32 %v1005, %v1224
        %v1229 = vmul.f32 %v1010, %v1224
        %v1230 = vmul.f32 %v1013, %v1224
        %v1231 = vmul.f32 %v1018, %v1224
        %v1232 = vmul.f32 %v1021, %v1224
        %v1233 = vpack.c.bf16 %v1226, %v1225
        %v1234 = vpack.c.bf16 %v1228, %v1227
        %v1235 = vpack.c.bf16 %v1230, %v1229
        %v1236 = vpack.c.bf16 %v1232, %v1231
        %v1237 = vpack.c.bf16 %v1189, %v1187
        %v1238 = vpack.c.bf16 %v1193, %v1191
        %v1239 = vpack.c.bf16 %v1197, %v1195
        %v1240 = vpack.c.bf16 %v1201, %v1199
        %v1242 = vsel %vm517, %v1233, 0
        %v1245 = vsel %vm517, %v1234, 0
        %v1248 = vsel %vm517, %v1235, 0
        %v1251 = vsel %vm517, %v1236, 0
        %v1254 = vsel %vm517, %v1237, 0
        %v1257 = vsel %vm517, %v1238, 0
        %v1260 = vsel %vm517, %v1239, 0
        %v1263 = vsel %vm517, %v1240, 0
        %1265 = vmatprep.subr.bf16.mxu0 0
        %1266 = vmatpush1.bf16.xpose.msra.mxu0 0
        %1267 = vmatprep.subr.bf16.mxu0 0
        %1268 = vmatpush1.bf16.xpose.msra.mxu0 0
        %1269 = vmatprep.subr.bf16.mxu0 0
        %1270 = vmatpush1.bf16.xpose.msra.mxu0 0
        %1271 = vmatprep.subr.bf16.mxu0 0
        %1272 = vmatpush1.bf16.xpose.msra.mxu0 0
        %1273 = vmatprep.subr.bf16.mxu0 0
        %1274 = vmatpush1.bf16.xpose.msra.mxu0 %v1263
        %1275 = vmatprep.subr.bf16.mxu0 0
        %1276 = vmatpush1.bf16.xpose.msra.mxu0 %v1260
        %1277 = vmatprep.subr.bf16.mxu0 0
        %1278 = vmatpush1.bf16.xpose.msra.mxu0 %v1257
        %1279 = vmatprep.subr.bf16.mxu0 0
        %1280 = vmatpush1.bf16.xpose.msra.mxu0 %v1254
        %1281 = vmatprep.subr.bf16.mxu0 0
        %1282 = vmatpush2.bf16.xpose.msra.mxu0 0
        %1283 = vmatprep.subr.bf16.mxu0 0
        %1284 = vmatpush2.bf16.xpose.msra.mxu0 0
        %1285 = vmatprep.subr.bf16.mxu0 0
        %1286 = vmatpush2.bf16.xpose.msra.mxu0 0
        %1287 = vmatprep.subr.bf16.mxu0 0
        %1288 = vmatpush2.bf16.xpose.msra.mxu0 0
        %1289 = vmatprep.subr.bf16.mxu0 0
        %1290 = vmatpush2.bf16.xpose.msra.mxu0 0
        %1291 = vmatprep.subr.bf16.mxu0 0
        %1292 = vmatpush2.bf16.xpose.msra.mxu0 0
        %1293 = vmatprep.subr.bf16.mxu0 0
        %1294 = vmatpush2.bf16.xpose.msra.mxu0 0
        %1295 = vmatprep.subr.bf16.mxu0 0
        %1296 = vmatpush2.bf16.xpose.msra.mxu0 0
        %1297 = vmatprep.mubr.bf16.mxu0 0
        %1298 = vmatmul.mubr.bf16.gmra.mxu0 %v1242
        %v1299 = vpop.f32.mrf.mxu0
        %v1300 = vadd.f32 %v962, %v1299
        %v1301 = vpop.f32.mrf.mxu0
        %v1302 = vpop.f32.mrf.mxu0
        %v1303 = vadd.f32 %v965, %v1302
        %v1304 = vpop.f32.mrf.mxu0
        %1305 = vmatprep.mubr.bf16.mxu0 0
        %1306 = vmatmul.mubr.bf16.gmra.mxu0 %v1245
        %v1307 = vpop.f32.mrf.mxu0
        %v1308 = vadd.f32 %v970, %v1307
        %v1309 = vpop.f32.mrf.mxu0
        %v1310 = vpop.f32.mrf.mxu0
        %v1311 = vadd.f32 %v973, %v1310
        %v1312 = vpop.f32.mrf.mxu0
        %1313 = vmatprep.mubr.bf16.mxu0 0
        %1314 = vmatmul.mubr.bf16.gmra.mxu0 %v1248
        %v1315 = vpop.f32.mrf.mxu0
        %v1316 = vadd.f32 %v978, %v1315
        %v1317 = vpop.f32.mrf.mxu0
        %v1318 = vpop.f32.mrf.mxu0
        %v1319 = vadd.f32 %v981, %v1318
        %v1320 = vpop.f32.mrf.mxu0
        %1321 = vmatprep.mubr.bf16.mxu0 0
        %1322 = vmatmul.mubr.bf16.gmra.mxu0 %v1251
        %v1323 = vpop.f32.mrf.mxu0
        %v1324 = vadd.f32 %v986, %v1323
        %v1325 = vpop.f32.mrf.mxu0
        %v1326 = vpop.f32.mrf.mxu0
        %v1327 = vadd.f32 %v989, %v1326
        %v1328 = vpop.f32.mrf.mxu0
        %1329 = vdwg.mxu0
        %v1330 = vld [vmem:[%s4] sm:$0xf]
        %v1331 = vld [vmem:[%s4 + $0x4] sm:$0xf]
        %v1332 = vld [vmem:[%s4 + $0x8] sm:$0xf]
        %v1333 = vld [vmem:[%s4 + $0xc] sm:$0xf]
        %v1334 = vld [vmem:[%s4 + $0x10] sm:$0xf]
        %v1335 = vld [vmem:[%s4 + $0x14] sm:$0xf]
        %v1336 = vld [vmem:[%s4 + $0x18] sm:$0xf]
        %v1337 = vld [vmem:[%s4 + $0x1c] sm:$0xf]
        %v1338 = vpack.c.bf16 %v1303, %v1300
        %v1339 = vpack.c.bf16 %v1311, %v1308
        %v1340 = vpack.c.bf16 %v1319, %v1316
        %v1341 = vpack.c.bf16 %v1327, %v1324
        %v1342 = vld [vmem:[%s7] sm:$0xff]
        %v1343 = vld [vmem:[%s7 + $0x8] sm:$0xff]
        %v1344 = vld [vmem:[%s7 + $0x10] sm:$0xff]
        %v1345 = vld [vmem:[%s7 + $0x18] sm:$0xff]
        %v1346 = vld [vmem:[%s7 + $0x20] sm:$0xff]
        %v1347 = vld [vmem:[%s7 + $0x28] sm:$0xff]
        %v1348 = vld [vmem:[%s7 + $0x30] sm:$0xff]
        %v1349 = vld [vmem:[%s7 + $0x38] sm:$0xff]
        %1351 = vset.pattern.permute.xlu0 0
        %1352 = vperm.xlu0 %1351, %v1342
        %v1353 = vpop.permute.xlu0 %1352
        %1356 = vset.pattern.permute.xlu0 0
        %1357 = vperm.xlu0 %1356, %v1343
        %v1358 = vpop.permute.xlu0 %1357
        %1361 = vset.pattern.permute.xlu0 0
        %1362 = vperm.xlu0 %1361, %v1344
        %v1363 = vpop.permute.xlu0 %1362
        %1366 = vset.pattern.permute.xlu0 0
        %1367 = vperm.xlu0 %1366, %v1345
        %v1368 = vpop.permute.xlu0 %1367
        %1371 = vset.pattern.permute.xlu0 0
        %1372 = vperm.xlu0 %1371, %v1346
        %v1373 = vpop.permute.xlu0 %1372
        %1376 = vset.pattern.permute.xlu0 0
        %1377 = vperm.xlu0 %1376, %v1347
        %v1378 = vpop.permute.xlu0 %1377
        %1381 = vset.pattern.permute.xlu0 0
        %1382 = vperm.xlu0 %1381, %v1348
        %v1383 = vpop.permute.xlu0 %1382
        %1386 = vset.pattern.permute.xlu0 0
        %1387 = vperm.xlu0 %1386, %v1349
        %v1388 = vpop.permute.xlu0 %1387
        %v1398 = vunpack.c.l.b16 %v1330
        %v1399 = vunpack.c.l.b16 %v1331
        %v1400 = vunpack.c.l.b16 %v1332
        %v1401 = vunpack.c.l.b16 %v1333
        %v1402 = vunpack.c.l.b16 %v1334
        %v1403 = vunpack.c.l.b16 %v1335
        %v1404 = vunpack.c.l.b16 %v1336
        %v1405 = vunpack.c.l.b16 %v1337
        %v1406 = vpack.c.b16 %v1399, %v1398
        %v1407 = vpack.c.b16 %v1401, %v1400
        %v1408 = vpack.c.b16 %v1403, %v1402
        %v1409 = vpack.c.b16 %v1405, %v1404
        %v1411 = vsel %vm517, %v1406, 0
        %v1414 = vsel %vm517, %v1407, 0
        %v1417 = vsel %vm517, %v1408, 0
        %v1420 = vsel %vm517, %v1409, 0
        %1422 = vmatprep.subr.bf16.mxu0 0
        %1423 = vmatpush1.bf16.msra.mxu0 0
        %1424 = vmatprep.subr.bf16.mxu0 0
        %1425 = vmatpush1.bf16.msra.mxu0 0
        %1426 = vmatprep.subr.bf16.mxu0 0
        %1427 = vmatpush1.bf16.msra.mxu0 0
        %1428 = vmatprep.subr.bf16.mxu0 0
        %1429 = vmatpush1.bf16.msra.mxu0 0
        %1430 = vmatprep.subr.bf16.mxu0 0
        %1431 = vmatpush1.bf16.msra.mxu0 %v1341
        %1432 = vmatprep.subr.bf16.mxu0 0
        %1433 = vmatpush1.bf16.msra.mxu0 %v1340
        %1434 = vmatprep.subr.bf16.mxu0 0
        %1435 = vmatpush1.bf16.msra.mxu0 %v1339
        %1436 = vmatprep.subr.bf16.mxu0 0
        %1437 = vmatpush1.bf16.msra.mxu0 %v1338
        %1438 = vmatprep.subr.bf16.mxu0 0
        %1439 = vmatpush2.bf16.msra.mxu0 0
        %1440 = vmatprep.subr.bf16.mxu0 0
        %1441 = vmatpush2.bf16.msra.mxu0 0
        %1442 = vmatprep.subr.bf16.mxu0 0
        %1443 = vmatpush2.bf16.msra.mxu0 0
        %1444 = vmatprep.subr.bf16.mxu0 0
        %1445 = vmatpush2.bf16.msra.mxu0 0
        %1446 = vmatprep.subr.bf16.mxu0 0
        %1447 = vmatpush2.bf16.msra.mxu0 0
        %1448 = vmatprep.subr.bf16.mxu0 0
        %1449 = vmatpush2.bf16.msra.mxu0 0
        %1450 = vmatprep.subr.bf16.mxu0 0
        %1451 = vmatpush2.bf16.msra.mxu0 0
        %1452 = vmatprep.subr.bf16.mxu0 0
        %1453 = vmatpush2.bf16.msra.mxu0 0
        %1454 = vmatprep.mubr.bf16.mxu0 0
        %1455 = vmatmul.mubr.bf16.gmra.mxu0 %v1411
        %v1456 = vpop.f32.mrf.mxu0
        %v1457 = vadd.f32 %v1353, %v1456
        %v1458 = vpop.f32.mrf.mxu0
        %v1459 = vpop.f32.mrf.mxu0
        %v1460 = vadd.f32 %v1358, %v1459
        %v1461 = vpop.f32.mrf.mxu0
        %1462 = vmatprep.mubr.bf16.mxu0 0
        %1463 = vmatmul.mubr.bf16.gmra.mxu0 %v1414
        %v1464 = vpop.f32.mrf.mxu0
        %v1465 = vadd.f32 %v1363, %v1464
        %v1466 = vpop.f32.mrf.mxu0
        %v1467 = vpop.f32.mrf.mxu0
        %v1468 = vadd.f32 %v1368, %v1467
        %v1469 = vpop.f32.mrf.mxu0
        %1470 = vmatprep.mubr.bf16.mxu0 0
        %1471 = vmatmul.mubr.bf16.gmra.mxu0 %v1417
        %v1472 = vpop.f32.mrf.mxu0
        %v1473 = vadd.f32 %v1373, %v1472
        %v1474 = vpop.f32.mrf.mxu0
        %v1475 = vpop.f32.mrf.mxu0
        %v1476 = vadd.f32 %v1378, %v1475
        %v1477 = vpop.f32.mrf.mxu0
        %1478 = vmatprep.mubr.bf16.mxu0 0
        %1479 = vmatmul.mubr.bf16.gmra.mxu0 %v1420
        %v1480 = vpop.f32.mrf.mxu0
        %v1481 = vadd.f32 %v1383, %v1480
        %v1482 = vpop.f32.mrf.mxu0
        %v1483 = vpop.f32.mrf.mxu0
        %v1484 = vadd.f32 %v1388, %v1483
        %v1485 = vpop.f32.mrf.mxu0
        %1486 = vdwg.mxu0
        %v1487 = vpack.c.bf16 %v612, %v609
        %v1488 = vpack.c.bf16 %v620, %v617
        %v1489 = vpack.c.bf16 %v628, %v625
        %v1490 = vpack.c.bf16 %v636, %v633
        %v1491 = vpack.c.bf16 %v1460, %v1457
        %v1492 = vpack.c.bf16 %v1468, %v1465
        %v1493 = vpack.c.bf16 %v1476, %v1473
        %v1494 = vpack.c.bf16 %v1484, %v1481
        %v1496 = vsel %vm517, %v1487, 0
        %v1499 = vsel %vm517, %v1488, 0
        %v1502 = vsel %vm517, %v1489, 0
        %v1505 = vsel %vm517, %v1490, 0
        %v1508 = vsel %vm517, %v1491, 0
        %v1511 = vsel %vm517, %v1492, 0
        %v1514 = vsel %vm517, %v1493, 0
        %v1517 = vsel %vm517, %v1494, 0
        %1519 = vmatprep.subr.bf16.mxu0 0
        %1520 = vmatpush1.bf16.xpose.msra.mxu0 0
        %1521 = vmatprep.subr.bf16.mxu0 0
        %1522 = vmatpush1.bf16.xpose.msra.mxu0 0
        %1523 = vmatprep.subr.bf16.mxu0 0
        %1524 = vmatpush1.bf16.xpose.msra.mxu0 0
        %1525 = vmatprep.subr.bf16.mxu0 0
        %1526 = vmatpush1.bf16.xpose.msra.mxu0 0
        %1527 = vmatprep.subr.bf16.mxu0 0
        %1528 = vmatpush1.bf16.xpose.msra.mxu0 %v1517
        %1529 = vmatprep.subr.bf16.mxu0 0
        %1530 = vmatpush1.bf16.xpose.msra.mxu0 %v1514
        %1531 = vmatprep.subr.bf16.mxu0 0
        %1532 = vmatpush1.bf16.xpose.msra.mxu0 %v1511
        %1533 = vmatprep.subr.bf16.mxu0 0
        %1534 = vmatpush1.bf16.xpose.msra.mxu0 %v1508
        %1535 = vmatprep.subr.bf16.mxu0 0
        %1536 = vmatpush2.bf16.xpose.msra.mxu0 0
        %1537 = vmatprep.subr.bf16.mxu0 0
        %1538 = vmatpush2.bf16.xpose.msra.mxu0 0
        %1539 = vmatprep.subr.bf16.mxu0 0
        %1540 = vmatpush2.bf16.xpose.msra.mxu0 0
        %1541 = vmatprep.subr.bf16.mxu0 0
        %1542 = vmatpush2.bf16.xpose.msra.mxu0 0
        %1543 = vmatprep.subr.bf16.mxu0 0
        %1544 = vmatpush2.bf16.xpose.msra.mxu0 0
        %1545 = vmatprep.subr.bf16.mxu0 0
        %1546 = vmatpush2.bf16.xpose.msra.mxu0 0
        %1547 = vmatprep.subr.bf16.mxu0 0
        %1548 = vmatpush2.bf16.xpose.msra.mxu0 0
        %1549 = vmatprep.subr.bf16.mxu0 0
        %1550 = vmatpush2.bf16.xpose.msra.mxu0 0
        %1551 = vmatprep.mubr.bf16.mxu0 0
        %1552 = vmatmul.mubr.bf16.gmra.mxu0 %v1496
        %v1553 = vpop.f32.mrf.mxu0
        %v1554 = vadd.f32 0.0, %v1553
        %v1555 = vpop.f32.mrf.mxu0
        %v1556 = vpop.f32.mrf.mxu0
        %v1557 = vadd.f32 0.0, %v1556
        %v1558 = vpop.f32.mrf.mxu0
        %1559 = vmatprep.mubr.bf16.mxu0 0
        %1560 = vmatmul.mubr.bf16.gmra.mxu0 %v1499
        %v1561 = vpop.f32.mrf.mxu0
        %v1562 = vadd.f32 0.0, %v1561
        %v1563 = vpop.f32.mrf.mxu0
        %v1564 = vpop.f32.mrf.mxu0
        %v1565 = vadd.f32 0.0, %v1564
        %v1566 = vpop.f32.mrf.mxu0
        %1567 = vmatprep.mubr.bf16.mxu0 0
        %1568 = vmatmul.mubr.bf16.gmra.mxu0 %v1502
        %v1569 = vpop.f32.mrf.mxu0
        %v1570 = vadd.f32 0.0, %v1569
        %v1571 = vpop.f32.mrf.mxu0
        %v1572 = vpop.f32.mrf.mxu0
        %v1573 = vadd.f32 0.0, %v1572
        %v1574 = vpop.f32.mrf.mxu0
        %1575 = vmatprep.mubr.bf16.mxu0 0
        %1576 = vmatmul.mubr.bf16.gmra.mxu0 %v1505
        %v1577 = vpop.f32.mrf.mxu0
        %v1578 = vadd.f32 0.0, %v1577
        %v1579 = vpop.f32.mrf.mxu0
        %v1580 = vpop.f32.mrf.mxu0
        %v1581 = vadd.f32 0.0, %v1580
        %v1582 = vpop.f32.mrf.mxu0
        %1583 = vdwg.mxu0
        %v1584 = vsel %vm517, %v1554, -inf
        %1585 = vmax.xlane.f32.xlu0 %v1584
        %v1586 = vpop.xlane.xlu0 %1585
        %v1587 = vsel %vm517, %v1557, -inf
        %1588 = vmax.xlane.f32.xlu0 %v1587
        %v1589 = vpop.xlane.xlu0 %1588
        %v1590 = vsel %vm517, %v1562, -inf
        %1591 = vmax.xlane.f32.xlu0 %v1590
        %v1592 = vpop.xlane.xlu0 %1591
        %v1593 = vsel %vm517, %v1565, -inf
        %1594 = vmax.xlane.f32.xlu0 %v1593
        %v1595 = vpop.xlane.xlu0 %1594
        %v1596 = vsel %vm517, %v1570, -inf
        %1597 = vmax.xlane.f32.xlu0 %v1596
        %v1598 = vpop.xlane.xlu0 %1597
        %v1599 = vsel %vm517, %v1573, -inf
        %1600 = vmax.xlane.f32.xlu0 %v1599
        %v1601 = vpop.xlane.xlu0 %1600
        %v1602 = vsel %vm517, %v1578, -inf
        %1603 = vmax.xlane.f32.xlu0 %v1602
        %v1604 = vpop.xlane.xlu0 %1603
        %v1605 = vsel %vm517, %v1581, -inf
        %1606 = vmax.xlane.f32.xlu0 %v1605
        %v1607 = vpop.xlane.xlu0 %1606
        %v1608 = vsub.f32 %v1554, %v1586
        %v1609 = vsub.f32 %v1557, %v1589
        %v1610 = vsub.f32 %v1562, %v1592
        %v1611 = vsub.f32 %v1565, %v1595
        %v1612 = vsub.f32 %v1570, %v1598
        %v1613 = vsub.f32 %v1573, %v1601
        %v1614 = vsub.f32 %v1578, %v1604
        %v1615 = vsub.f32 %v1581, %v1607
        %v1616 = vmul.f32 %v1608, 1.442695
        %v1617 = vpow.pop %v1616
        %v1618 = vmul.f32 %v1609, 1.442695
        %v1619 = vpow.pop %v1618
        %v1620 = vmul.f32 %v1610, 1.442695
        %v1621 = vpow.pop %v1620
        %v1622 = vmul.f32 %v1611, 1.442695
        %v1623 = vpow.pop %v1622
        %v1624 = vmul.f32 %v1612, 1.442695
        %v1625 = vpow.pop %v1624
        %v1626 = vmul.f32 %v1613, 1.442695
        %v1627 = vpow.pop %v1626
        %v1628 = vmul.f32 %v1614, 1.442695
        %v1629 = vpow.pop %v1628
        %v1630 = vmul.f32 %v1615, 1.442695
        %v1631 = vpow.pop %v1630
        %v1632 = vsel %vm517, %v1617, 0.0
        %1633 = vadd.xlane.f32.xlu0 %v1632
        %v1634 = vpop.xlane.xlu0 %1633
        %v1635 = vsel %vm517, %v1619, 0.0
        %1636 = vadd.xlane.f32.xlu0 %v1635
        %v1637 = vpop.xlane.xlu0 %1636
        %v1638 = vsel %vm517, %v1621, 0.0
        %1639 = vadd.xlane.f32.xlu0 %v1638
        %v1640 = vpop.xlane.xlu0 %1639
        %v1641 = vsel %vm517, %v1623, 0.0
        %1642 = vadd.xlane.f32.xlu0 %v1641
        %v1643 = vpop.xlane.xlu0 %1642
        %v1644 = vsel %vm517, %v1625, 0.0
        %1645 = vadd.xlane.f32.xlu0 %v1644
        %v1646 = vpop.xlane.xlu0 %1645
        %v1647 = vsel %vm517, %v1627, 0.0
        %1648 = vadd.xlane.f32.xlu0 %v1647
        %v1649 = vpop.xlane.xlu0 %1648
        %v1650 = vsel %vm517, %v1629, 0.0
        %1651 = vadd.xlane.f32.xlu0 %v1650
        %v1652 = vpop.xlane.xlu0 %1651
        %v1653 = vsel %vm517, %v1631, 0.0
        %1654 = vadd.xlane.f32.xlu0 %v1653
        %v1655 = vpop.xlane.xlu0 %1654
        %v1656 = vrcp.pop %v1634
        %v1657 = vmul.f32 1.0, %v1656
        %v1658 = vrcp.pop %v1637
        %v1659 = vmul.f32 1.0, %v1658
        %v1660 = vrcp.pop %v1640
        %v1661 = vmul.f32 1.0, %v1660
        %v1662 = vrcp.pop %v1643
        %v1663 = vmul.f32 1.0, %v1662
        %v1664 = vrcp.pop %v1646
        %v1665 = vmul.f32 1.0, %v1664
        %v1666 = vrcp.pop %v1649
        %v1667 = vmul.f32 1.0, %v1666
        %v1668 = vrcp.pop %v1652
        %v1669 = vmul.f32 1.0, %v1668
        %v1670 = vrcp.pop %v1655
        %v1671 = vmul.f32 1.0, %v1670
        %v1672 = vmul.f32 %v1617, %v1657
        %v1673 = vmul.f32 %v1619, %v1659
        %v1674 = vmul.f32 %v1621, %v1661
        %v1675 = vmul.f32 %v1623, %v1663
        %v1676 = vmul.f32 %v1625, %v1665
        %v1677 = vmul.f32 %v1627, %v1667
        %v1678 = vmul.f32 %v1629, %v1669
        %v1679 = vmul.f32 %v1631, %v1671
        %v1680 = vpack.c.bf16 %v1673, %v1672
        %v1681 = vpack.c.bf16 %v1675, %v1674
        %v1682 = vpack.c.bf16 %v1677, %v1676
        %v1683 = vpack.c.bf16 %v1679, %v1678
        %v1684 = vpack.c.bf16 %v1029, %v1026
        %v1685 = vpack.c.bf16 %v1037, %v1034
        %v1686 = vpack.c.bf16 %v1045, %v1042
        %v1687 = vpack.c.bf16 %v1053, %v1050
        %v1689 = vsel %vm517, %v1680, 0
        %v1692 = vsel %vm517, %v1681, 0
        %v1695 = vsel %vm517, %v1682, 0
        %v1698 = vsel %vm517, %v1683, 0
        %1700 = vmatprep.subr.bf16.mxu0 0
        %1701 = vmatpush1.bf16.msra.mxu0 0
        %1702 = vmatprep.subr.bf16.mxu0 0
        %1703 = vmatpush1.bf16.msra.mxu0 0
        %1704 = vmatprep.subr.bf16.mxu0 0
        %1705 = vmatpush1.bf16.msra.mxu0 0
        %1706 = vmatprep.subr.bf16.mxu0 0
        %1707 = vmatpush1.bf16.msra.mxu0 0
        %1708 = vmatprep.subr.bf16.mxu0 0
        %1709 = vmatpush1.bf16.msra.mxu0 %v1687
        %1710 = vmatprep.subr.bf16.mxu0 0
        %1711 = vmatpush1.bf16.msra.mxu0 %v1686
        %1712 = vmatprep.subr.bf16.mxu0 0
        %1713 = vmatpush1.bf16.msra.mxu0 %v1685
        %1714 = vmatprep.subr.bf16.mxu0 0
        %1715 = vmatpush1.bf16.msra.mxu0 %v1684
        %1716 = vmatprep.subr.bf16.mxu0 0
        %1717 = vmatpush2.bf16.msra.mxu0 0
        %1718 = vmatprep.subr.bf16.mxu0 0
        %1719 = vmatpush2.bf16.msra.mxu0 0
        %1720 = vmatprep.subr.bf16.mxu0 0
        %1721 = vmatpush2.bf16.msra.mxu0 0
        %1722 = vmatprep.subr.bf16.mxu0 0
        %1723 = vmatpush2.bf16.msra.mxu0 0
        %1724 = vmatprep.subr.bf16.mxu0 0
        %1725 = vmatpush2.bf16.msra.mxu0 0
        %1726 = vmatprep.subr.bf16.mxu0 0
        %1727 = vmatpush2.bf16.msra.mxu0 0
        %1728 = vmatprep.subr.bf16.mxu0 0
        %1729 = vmatpush2.bf16.msra.mxu0 0
        %1730 = vmatprep.subr.bf16.mxu0 0
        %1731 = vmatpush2.bf16.msra.mxu0 0
        %1732 = vmatprep.mubr.bf16.mxu0 0
        %1733 = vmatmul.mubr.bf16.gmra.mxu0 %v1689
        %v1734 = vpop.f32.mrf.mxu0
        %v1735 = vadd.f32 0.0, %v1734
        %v1736 = vpop.f32.mrf.mxu0
        %v1737 = vpop.f32.mrf.mxu0
        %v1738 = vadd.f32 0.0, %v1737
        %v1739 = vpop.f32.mrf.mxu0
        %1740 = vmatprep.mubr.bf16.mxu0 0
        %1741 = vmatmul.mubr.bf16.gmra.mxu0 %v1692
        %v1742 = vpop.f32.mrf.mxu0
        %v1743 = vadd.f32 0.0, %v1742
        %v1744 = vpop.f32.mrf.mxu0
        %v1745 = vpop.f32.mrf.mxu0
        %v1746 = vadd.f32 0.0, %v1745
        %v1747 = vpop.f32.mrf.mxu0
        %1748 = vmatprep.mubr.bf16.mxu0 0
        %1749 = vmatmul.mubr.bf16.gmra.mxu0 %v1695
        %v1750 = vpop.f32.mrf.mxu0
        %v1751 = vadd.f32 0.0, %v1750
        %v1752 = vpop.f32.mrf.mxu0
        %v1753 = vpop.f32.mrf.mxu0
        %v1754 = vadd.f32 0.0, %v1753
        %v1755 = vpop.f32.mrf.mxu0
        %1756 = vmatprep.mubr.bf16.mxu0 0
        %1757 = vmatmul.mubr.bf16.gmra.mxu0 %v1698
        %v1758 = vpop.f32.mrf.mxu0
        %v1759 = vadd.f32 0.0, %v1758
        %v1760 = vpop.f32.mrf.mxu0
        %v1761 = vpop.f32.mrf.mxu0
        %v1762 = vadd.f32 0.0, %v1761
        %v1763 = vpop.f32.mrf.mxu0
        %1764 = vdwg.mxu0
        %1765 = vst.msk [vmem:[%s313] sm:$0xff] %vm517, %v1735
        %1766 = vst.msk [vmem:[%s313 + $0x8] sm:$0xff] %vm517, %v1738
        %1767 = vst.msk [vmem:[%s313 + $0x10] sm:$0xff] %vm517, %v1743
        %1768 = vst.msk [vmem:[%s313 + $0x18] sm:$0xff] %vm517, %v1746
        %1769 = vst.msk [vmem:[%s313 + $0x20] sm:$0xff] %vm517, %v1751
        %1770 = vst.msk [vmem:[%s313 + $0x28] sm:$0xff] %vm517, %v1754
        %1771 = vst.msk [vmem:[%s313 + $0x30] sm:$0xff] %vm517, %v1759
        %1772 = vst.msk [vmem:[%s313 + $0x38] sm:$0xff] %vm517, %v1762
        %s1773 = sand.u32 %s208, 1
        %s1774 = scalar_lea.sflag [#allocation3], %s1773
        %s1775 = sand.u32 %s208, 1
        %s1776 = smul.addr %s1775, 64
        %s1777 = scalar_lea.vmem [#allocation2], %s1776
        // Predicated region
        $region53: #{tpu_custom_call.1} parent=51 // pred_check
          %p1778 = pneg %p218
        $region54: #{tpu_custom_call.1} parent=51 // pred_check_branch
          %1780 = sbr.rel (%p1778) target = $region56
        $region55: #{tpu_custom_call.1} parent=51 // pred_region
          %s1782 = ssub.s32 1024, 1024
          %1783 = vsyncadd %s1774, %s1782
          %s1784 = smul.addr %s22, 8
          %s1785 = smul.addr %s1784, 128
          %s1786 = scalar_lea.hbm %s8, %s1785
          %s1787 = sshll.u32 %s1777, 4
          %s1788 = int_to_ptr.vmem [resolvable:$true] %s1787
          %1793 = dma.vmem_to_hbm [thread:$0]  %s1788, 1024, %s1786, %s1774, 128, 128, 8
        $region56: #{tpu_custom_call.1} parent=51 // pred_fallthru
          _
      $region52: #{tpu_custom_call.1} parent=5 // pred_fallthru
        _
      %p1794 = scmp.le.s32.totalorder 2, %s17
      // Predicated region
      $region57: #{tpu_custom_call.1} parent=5 // pred_check
        %p1795 = pneg %p1794
      $region58: #{tpu_custom_call.1} parent=5 // pred_check_branch
        %1797 = sbr.rel (%p1795) target = $region60
      $region59: #{tpu_custom_call.1} parent=5 // pred_region
        %s1798 = ssub.s32 %s17, 2
        // Predicated region
        $region61: #{tpu_custom_call.1} parent=59 // pred_check
          %p1799 = pneg %p224
        $region62: #{tpu_custom_call.1} parent=59 // pred_check_branch
          %1801 = sbr.rel (%p1799) target = $region64
        $region63: #{tpu_custom_call.1} parent=59 // pred_region
          %s1802 = sand.u32 %s209, 1
          %s1803 = scalar_lea.sflag [#allocation3], %s1802
          %s1804 = sand.u32 %s209, 1
          %s1805 = smul.addr %s1804, 64
          %s1806 = scalar_lea.vmem [#allocation2], %s1805
          %1807 = dma.done %s1803, 1024
        $region64: #{tpu_custom_call.1} parent=59 // pred_fallthru
          _
      $region60: #{tpu_custom_call.1} parent=5 // pred_fallthru
        _
    $region6: #{tpu_custom_call.1} parent=1 // loop_footer
      %s21 = sadd.s32 1, %s17
    $region7: #{tpu_custom_call.1} parent=1 // loop_footer_branch
      %16 = sbr.rel target = $region3
    $region8: #{tpu_custom_call.1} parent=1 // loop_exit
      _
    %1808 = vsyncpa [#allocation3], 1
    %s1809 = scalar_lea.sflag [#allocation3], 1
    %1810 = vsyncpa %s1809, 1

</llo_original>
